<compile_context>
chip_gen: v6e
topology: v6e:2x2x1
jax: 0.10.0
libtpu: 0.0.40
codegen_flags: <defaults>
</compile_context>

<pallas_src>
import functools

import jax
import jax.numpy as jnp
from jax import lax
from jax.experimental import pallas as pl
from jax.experimental.pallas import tpu as pltpu


def basic_block_kernel(x_ref, w1_ref, b1_ref, w2_ref, b2_ref, mask_ref, out_ref,
                       *, TH, Wp, use_tanh):
    """One (batch, row-tile) block.

    x_ref   : (Cin, WIN)   bf16  flattened zero-padded (TH+4)-row input window,
                                 WIN = (TH+4)*Wp + 4, Wp = W + 2
    w1_ref  : (9, Cout, Cin)  bf16  conv1 weights (BN1 scale folded), tap=kh*3+kw
    b1_ref  : (Cout, 1)    f32   folded BN1 bias
    w2_ref  : (9, Cout, Cout) bf16  conv2 weights (BN2 scale folded)
    b2_ref  : (Cout, 1)    f32   folded BN2 bias
    mask_ref: (1, L1e)     f32   1.0 on valid (in-image, non-pad) y1 lanes
    out_ref : (Cout, L2)   f32   L2 = TH*Wp, this tile's output rows (NCHW order)
    """
    L1e = (TH + 2) * Wp + 2      # conv1/y1 lanes (tile rows + 1 halo row each side)
    L2 = TH * Wp                 # conv2 / output lanes

    x = x_ref[...]               # (Cin, WIN) bf16

    def conv3x3_taps(w_ref, src, m_len):
        # 3x3 conv as 9 accumulating MXU matmuls over shifted lane windows.
        acc = None
        for kh in range(3):
            for kw in range(3):
                off = kh * Wp + kw          # = (1+dh)*Wp + (1+dw), dh=kh-1, dw=kw-1
                d = jnp.dot(w_ref[kh * 3 + kw], src[:, off:off + m_len],
                            preferred_element_type=jnp.float32)
                acc = d if acc is None else acc + d
        return acc                          # (Cout, m_len) f32

    # ---- conv1 (+ folded bn1) -> bias + ReLU ----
    acc1 = conv3x3_taps(w1_ref, x, L1e)
    # Zero pad-columns / out-of-image rows so conv2 sees exactly the
    # zero-padded y1 the reference semantics require.
    y1 = jnp.maximum(acc1 + b1_ref[...], 0.0) * mask_ref[...]
    y1b = y1.astype(jnp.bfloat16)

    # ---- conv2 (+ folded bn2) ----
    acc2 = conv3x3_taps(w2_ref, y1b, L2)

    # ---- bias + identity residual + final activation (f32) ----
    resid = x[:, 2 * Wp + 2: 2 * Wp + 2 + L2].astype(jnp.float32)
    out = acc2 + b2_ref[...] + resid
    out = jnp.tanh(out) if use_tanh else jnp.maximum(out, 0.0)
    out_ref[...] = out.astype(out_ref.dtype)


def basic_block(x_nchw, w1, g1, be1, m1, v1, w2, g2, be2, m2, v2,
                eps=1e-5, use_tanh=False, row_tile=None):
    """x_nchw: (N, C, H, W) float32.  Conv weights in PyTorch OIHW layout."""
    N, C, H, W = x_nchw.shape
    Cout = w1.shape[0]
    assert Cout == C, "identity shortcut requires inplanes == planes (downsample=None)"
    # TODO(synk): stride != 1 / downsample path not implemented.

    if row_tile is None:                    # largest divisor of H that is <= 32
        row_tile = H
        for cand in range(min(H, 32), 0, -1):
            if H % cand == 0:
                row_tile = cand
                break
    TH = row_tile
    assert H % TH == 0, "row_tile must divide H"
    T = H // TH
    Wp = W + 2                               # one zero pad column each side
    WIN = (TH + 4) * Wp + 4                  # input window lanes per tile
    L1e = (TH + 2) * Wp + 2                  # y1 lanes per tile
    L2 = TH * Wp                             # output lanes per tile

    # ---- fold BatchNorm (eval) into conv weights + per-channel biases ----
    s1 = g1 / jnp.sqrt(v1 + eps)
    b1 = (be1 - m1 * s1).reshape(Cout, 1).astype(jnp.float32)
    s2 = g2 / jnp.sqrt(v2 + eps)
    b2 = (be2 - m2 * s2).reshape(Cout, 1).astype(jnp.float32)
    # OIHW * scale[out] -> (kh, kw, Cout, Cin) -> (9, Cout, Cin), bf16 for the MXU.
    w1f = (w1 * s1[:, None, None, None]).transpose(2, 3, 0, 1) \
        .reshape(9, Cout, C).astype(jnp.bfloat16)
    w2f = (w2 * s2[:, None, None, None]).transpose(2, 3, 0, 1) \
        .reshape(9, Cout, Cout).astype(jnp.bfloat16)

    # ---- pad + unfold overlapping (TH+4)-row windows (conv halo), bf16 ----
    xp = jnp.pad(x_nchw, ((0, 0), (0, 0), (2, 2), (1, 1))).astype(jnp.bfloat16)
    rows = (jnp.arange(T) * TH)[:, None] + jnp.arange(TH + 4)[None, :]   # (T, TH+4)
    xw = xp[:, :, rows, :]                                   # (N, C, T, TH+4, Wp)
    xw = jnp.transpose(xw, (0, 2, 1, 3, 4)).reshape(N, T, C, (TH + 4) * Wp)
    xw = jnp.pad(xw, ((0, 0), (0, 0), (0, 0), (2, 2)))       # (N, T, C, WIN)

    # ---- per-tile validity mask for y1 (in-image rows, non-pad columns) ----
    hp = (jnp.arange(T) * TH)[:, None, None] + 1 + jnp.arange(TH + 2)[None, :, None]
    row_ok = (hp >= 2) & (hp <= H + 1)                       # padded-row index in image
    col_ok = (jnp.arange(Wp) >= 1) & (jnp.arange(Wp) <= W)
    m = (row_ok & col_ok[None, None, :]).astype(jnp.float32) \
        .reshape(T, 1, (TH + 2) * Wp)
    mask = jnp.pad(m, ((0, 0), (0, 0), (1, 1)))              # (T, 1, L1e)

    kernel = functools.partial(basic_block_kernel, TH=TH, Wp=Wp, use_tanh=use_tanh)

    out_tiles = pl.pallas_call(
        kernel,
        out_shape=jax.ShapeDtypeStruct((N, T, Cout, L2), x_nchw.dtype),
        grid=(N, T),
        in_specs=[
            pl.BlockSpec((None, None, C, WIN), lambda n, t: (n, t, 0, 0)),
            pl.BlockSpec((9, Cout, C), lambda n, t: (0, 0, 0)),
            pl.BlockSpec((Cout, 1), lambda n, t: (0, 0)),
            pl.BlockSpec((9, Cout, Cout), lambda n, t: (0, 0, 0)),
            pl.BlockSpec((Cout, 1), lambda n, t: (0, 0)),
            pl.BlockSpec((None, 1, L1e), lambda n, t: (t, 0, 0)),
        ],
        out_specs=pl.BlockSpec((None, None, Cout, L2), lambda n, t: (n, t, 0, 0)),
        compiler_params=pltpu.CompilerParams(
            # No persistent scratch / init-once step -> both axes can be
            # parallel (lets Mosaic shard across v7x's two TensorCores).
            dimension_semantics=("parallel", "parallel"),
            # Explicit limit; per-tile footprint is far below v7x's 64 MiB.
            vmem_limit_bytes=48 * 1024 * 1024,
        ),
    )(xw, w1f, b1, w2f, b2, mask)

    # (N, T, Cout, TH*Wp) -> (N, Cout, H, Wp) -> drop pad columns -> NCHW.
    out = out_tiles.reshape(N, T, Cout, TH, Wp).transpose(0, 2, 1, 3, 4) \
        .reshape(N, Cout, H, Wp)
    return out[:, :, :, 1:W + 1]


def ref_basic_block(x, w1, s1, b1, w2, s2, b2, use_tanh=False):
    """Pure-JAX f32 reference (NCHW, OIHW) with BN folded into scale/bias."""
    dn = lax.conv_dimension_numbers(x.shape, w1.shape, ('NCHW', 'OIHW', 'NCHW'))
    y = lax.conv_general_dilated(x, w1, (1, 1), ((1, 1), (1, 1)),
                                 dimension_numbers=dn)
    y = y * s1[None, :, None, None] + b1[None, :, None, None]
    y = jnp.maximum(y, 0.0)
    y = lax.conv_general_dilated(y, w2, (1, 1), ((1, 1), (1, 1)),
                                 dimension_numbers=dn)
    y = y * s2[None, :, None, None] + b2[None, :, None, None]
    y = y + x
    return jnp.tanh(y) if use_tanh else jnp.maximum(y, 0.0)


if __name__ == "__main__":
    key = jax.random.PRNGKey(0)
    N, C, H, W = 2, 8, 16, 16            # inplanes == planes, stride=1
    ks = jax.random.split(key, 11)

    x = jax.random.normal(ks[0], (N, C, H, W), jnp.float32)

    # conv weights, PyTorch OIHW
    w1 = 0.1 * jax.random.normal(ks[1], (C, C, 3, 3), jnp.float32)
    w2 = 0.1 * jax.random.normal(ks[2], (C, C, 3, 3), jnp.float32)
    # BatchNorm params (gamma, beta, running_mean, running_var)
    g1 = 1.0 + 0.1 * jax.random.normal(ks[3], (C,), jnp.float32)
    be1 = 0.1 * jax.random.normal(ks[4], (C,), jnp.float32)
    m1 = 0.1 * jax.random.normal(ks[5], (C,), jnp.float32)
    v1 = 0.5 + jnp.abs(jax.random.normal(ks[6], (C,), jnp.float32))
    g2 = 1.0 + 0.1 * jax.random.normal(ks[7], (C,), jnp.float32)
    be2 = 0.1 * jax.random.normal(ks[8], (C,), jnp.float32)
    m2 = 0.1 * jax.random.normal(ks[9], (C,), jnp.float32)
    v2 = 0.5 + jnp.abs(jax.random.normal(ks[10], (C,), jnp.float32))

    # row_tile=8 -> grid (N=2, T=2): exercises batch axis, row tiling and the
    # top/bottom image-boundary masks.
    out = basic_block(x, w1, g1, be1, m1, v1, w2, g2, be2, m2, v2, row_tile=8)
    out = jax.block_until_ready(out)

    eps = 1e-5
    s1 = g1 / jnp.sqrt(v1 + eps); b1 = be1 - m1 * s1
    s2 = g2 / jnp.sqrt(v2 + eps); b2 = be2 - m2 * s2
    ref = ref_basic_block(x, w1, s1, b1, w2, s2, b2)

    assert out.shape == (N, C, H, W)
    err = jnp.max(jnp.abs(out - ref))
    # bf16 matmul operands / bf16 activation I/O (f32 accumulation) -> loose tol.
    assert jnp.allclose(out, ref, atol=5e-2, rtol=5e-2), f"max abs err = {err}"
    print("KERNEL_OK")
</pallas_src>

<mosaic_0001>
module attributes {stable_mosaic.version = 11 : i64} {
  func.func @basic_block_kernel(%arg0: i32, %arg1: i32, %arg2: memref<1x1x8x220xbf16, #tpu.memory_space<vmem>>, %arg3: memref<9x8x8xbf16, #tpu.memory_space<vmem>>, %arg4: memref<8x1xf32, #tpu.memory_space<vmem>>, %arg5: memref<9x8x8xbf16, #tpu.memory_space<vmem>>, %arg6: memref<8x1xf32, #tpu.memory_space<vmem>>, %arg7: memref<1x1x182xf32, #tpu.memory_space<vmem>>, %arg8: memref<1x1x8x144xf32, #tpu.memory_space<vmem>>) attributes {dimension_semantics = [#tpu.dimension_semantics<parallel>, #tpu.dimension_semantics<parallel>], iteration_bounds = array<i64: 2, 2>, scalar_prefetch = 0 : i64, scratch_operands = 0 : i64, tpu.core_type = #tpu.core_type<tc>, window_params = [{transform_indices = @transform_0, window_bounds = array<i64: 1, 1, 8, 220>}, {pipeline_mode = #tpu.pipeline_mode<synchronous>, transform_indices = @transform_1, window_bounds = array<i64: 9, 8, 8>}, {pipeline_mode = #tpu.pipeline_mode<synchronous>, transform_indices = @transform_2, window_bounds = array<i64: 8, 1>}, {pipeline_mode = #tpu.pipeline_mode<synchronous>, transform_indices = @transform_3, window_bounds = array<i64: 9, 8, 8>}, {pipeline_mode = #tpu.pipeline_mode<synchronous>, transform_indices = @transform_4, window_bounds = array<i64: 8, 1>}, {transform_indices = @transform_5, window_bounds = array<i64: 1, 1, 182>}, {transform_indices = @transform_6, window_bounds = array<i64: 1, 1, 8, 144>}]} {
    %c0 = arith.constant 0 : index
    %c0_0 = arith.constant 0 : index
    %c0_1 = arith.constant 0 : index
    %c0_2 = arith.constant 0 : index
    %0 = vector.load %arg2[%c0, %c0_0, %c0_1, %c0_2] : memref<1x1x8x220xbf16, #tpu.memory_space<vmem>>, vector<1x1x8x220xbf16>
    %1 = vector.shape_cast %0 : vector<1x1x8x220xbf16> to vector<8x220xbf16>
    %c0_3 = arith.constant 0 : index
    %c0_4 = arith.constant 0 : index
    %c0_5 = arith.constant 0 : index
    %2 = vector.load %arg3[%c0_3, %c0_4, %c0_5] : memref<9x8x8xbf16, #tpu.memory_space<vmem>>, vector<1x8x8xbf16>
    %3 = vector.shape_cast %2 : vector<1x8x8xbf16> to vector<8x8xbf16>
    %4 = vector.extract_strided_slice %1 {offsets = [0, 0], sizes = [8, 182], strides = [1, 1]} : vector<8x220xbf16> to vector<8x182xbf16>
    %cst = arith.constant dense<0.000000e+00> : vector<8x182xf32>
    %5 = tpu.matmul %3, %4, %cst {dimension_numbers = #tpu.dot_dimension_numbers<[1], [0], [0], [1], [0, 0, 1, 1], [], []>} : vector<8x8xbf16>, vector<8x182xbf16>, vector<8x182xf32> -> vector<8x182xf32>
    %c1 = arith.constant 1 : index
    %c0_6 = arith.constant 0 : index
    %c0_7 = arith.constant 0 : index
    %6 = vector.load %arg3[%c1, %c0_6, %c0_7] : memref<9x8x8xbf16, #tpu.memory_space<vmem>>, vector<1x8x8xbf16>
    %7 = vector.shape_cast %6 : vector<1x8x8xbf16> to vector<8x8xbf16>
    %8 = vector.extract_strided_slice %1 {offsets = [0, 1], sizes = [8, 182], strides = [1, 1]} : vector<8x220xbf16> to vector<8x182xbf16>
    %cst_8 = arith.constant dense<0.000000e+00> : vector<8x182xf32>
    %9 = tpu.matmul %7, %8, %cst_8 {dimension_numbers = #tpu.dot_dimension_numbers<[1], [0], [0], [1], [0, 0, 1, 1], [], []>} : vector<8x8xbf16>, vector<8x182xbf16>, vector<8x182xf32> -> vector<8x182xf32>
    %10 = arith.addf %5, %9 : vector<8x182xf32>
    %c2 = arith.constant 2 : index
    %c0_9 = arith.constant 0 : index
    %c0_10 = arith.constant 0 : index
    %11 = vector.load %arg3[%c2, %c0_9, %c0_10] : memref<9x8x8xbf16, #tpu.memory_space<vmem>>, vector<1x8x8xbf16>
    %12 = vector.shape_cast %11 : vector<1x8x8xbf16> to vector<8x8xbf16>
    %13 = vector.extract_strided_slice %1 {offsets = [0, 2], sizes = [8, 182], strides = [1, 1]} : vector<8x220xbf16> to vector<8x182xbf16>
    %cst_11 = arith.constant dense<0.000000e+00> : vector<8x182xf32>
    %14 = tpu.matmul %12, %13, %cst_11 {dimension_numbers = #tpu.dot_dimension_numbers<[1], [0], [0], [1], [0, 0, 1, 1], [], []>} : vector<8x8xbf16>, vector<8x182xbf16>, vector<8x182xf32> -> vector<8x182xf32>
    %15 = arith.addf %10, %14 : vector<8x182xf32>
    %c3 = arith.constant 3 : index
    %c0_12 = arith.constant 0 : index
    %c0_13 = arith.constant 0 : index
    %16 = vector.load %arg3[%c3, %c0_12, %c0_13] : memref<9x8x8xbf16, #tpu.memory_space<vmem>>, vector<1x8x8xbf16>
    %17 = vector.shape_cast %16 : vector<1x8x8xbf16> to vector<8x8xbf16>
    %18 = vector.extract_strided_slice %1 {offsets = [0, 18], sizes = [8, 182], strides = [1, 1]} : vector<8x220xbf16> to vector<8x182xbf16>
    %cst_14 = arith.constant dense<0.000000e+00> : vector<8x182xf32>
    %19 = tpu.matmul %17, %18, %cst_14 {dimension_numbers = #tpu.dot_dimension_numbers<[1], [0], [0], [1], [0, 0, 1, 1], [], []>} : vector<8x8xbf16>, vector<8x182xbf16>, vector<8x182xf32> -> vector<8x182xf32>
    %20 = arith.addf %15, %19 : vector<8x182xf32>
    %c4 = arith.constant 4 : index
    %c0_15 = arith.constant 0 : index
    %c0_16 = arith.constant 0 : index
    %21 = vector.load %arg3[%c4, %c0_15, %c0_16] : memref<9x8x8xbf16, #tpu.memory_space<vmem>>, vector<1x8x8xbf16>
    %22 = vector.shape_cast %21 : vector<1x8x8xbf16> to vector<8x8xbf16>
    %23 = vector.extract_strided_slice %1 {offsets = [0, 19], sizes = [8, 182], strides = [1, 1]} : vector<8x220xbf16> to vector<8x182xbf16>
    %cst_17 = arith.constant dense<0.000000e+00> : vector<8x182xf32>
    %24 = tpu.matmul %22, %23, %cst_17 {dimension_numbers = #tpu.dot_dimension_numbers<[1], [0], [0], [1], [0, 0, 1, 1], [], []>} : vector<8x8xbf16>, vector<8x182xbf16>, vector<8x182xf32> -> vector<8x182xf32>
    %25 = arith.addf %20, %24 : vector<8x182xf32>
    %c5 = arith.constant 5 : index
    %c0_18 = arith.constant 0 : index
    %c0_19 = arith.constant 0 : index
    %26 = vector.load %arg3[%c5, %c0_18, %c0_19] : memref<9x8x8xbf16, #tpu.memory_space<vmem>>, vector<1x8x8xbf16>
    %27 = vector.shape_cast %26 : vector<1x8x8xbf16> to vector<8x8xbf16>
    %28 = vector.extract_strided_slice %1 {offsets = [0, 20], sizes = [8, 182], strides = [1, 1]} : vector<8x220xbf16> to vector<8x182xbf16>
    %cst_20 = arith.constant dense<0.000000e+00> : vector<8x182xf32>
    %29 = tpu.matmul %27, %28, %cst_20 {dimension_numbers = #tpu.dot_dimension_numbers<[1], [0], [0], [1], [0, 0, 1, 1], [], []>} : vector<8x8xbf16>, vector<8x182xbf16>, vector<8x182xf32> -> vector<8x182xf32>
    %30 = arith.addf %25, %29 : vector<8x182xf32>
    %c6 = arith.constant 6 : index
    %c0_21 = arith.constant 0 : index
    %c0_22 = arith.constant 0 : index
    %31 = vector.load %arg3[%c6, %c0_21, %c0_22] : memref<9x8x8xbf16, #tpu.memory_space<vmem>>, vector<1x8x8xbf16>
    %32 = vector.shape_cast %31 : vector<1x8x8xbf16> to vector<8x8xbf16>
    %33 = vector.extract_strided_slice %1 {offsets = [0, 36], sizes = [8, 182], strides = [1, 1]} : vector<8x220xbf16> to vector<8x182xbf16>
    %cst_23 = arith.constant dense<0.000000e+00> : vector<8x182xf32>
    %34 = tpu.matmul %32, %33, %cst_23 {dimension_numbers = #tpu.dot_dimension_numbers<[1], [0], [0], [1], [0, 0, 1, 1], [], []>} : vector<8x8xbf16>, vector<8x182xbf16>, vector<8x182xf32> -> vector<8x182xf32>
    %35 = arith.addf %30, %34 : vector<8x182xf32>
    %c7 = arith.constant 7 : index
    %c0_24 = arith.constant 0 : index
    %c0_25 = arith.constant 0 : index
    %36 = vector.load %arg3[%c7, %c0_24, %c0_25] : memref<9x8x8xbf16, #tpu.memory_space<vmem>>, vector<1x8x8xbf16>
    %37 = vector.shape_cast %36 : vector<1x8x8xbf16> to vector<8x8xbf16>
    %38 = vector.extract_strided_slice %1 {offsets = [0, 37], sizes = [8, 182], strides = [1, 1]} : vector<8x220xbf16> to vector<8x182xbf16>
    %cst_26 = arith.constant dense<0.000000e+00> : vector<8x182xf32>
    %39 = tpu.matmul %37, %38, %cst_26 {dimension_numbers = #tpu.dot_dimension_numbers<[1], [0], [0], [1], [0, 0, 1, 1], [], []>} : vector<8x8xbf16>, vector<8x182xbf16>, vector<8x182xf32> -> vector<8x182xf32>
    %40 = arith.addf %35, %39 : vector<8x182xf32>
    %c8 = arith.constant 8 : index
    %c0_27 = arith.constant 0 : index
    %c0_28 = arith.constant 0 : index
    %41 = vector.load %arg3[%c8, %c0_27, %c0_28] : memref<9x8x8xbf16, #tpu.memory_space<vmem>>, vector<1x8x8xbf16>
    %42 = vector.shape_cast %41 : vector<1x8x8xbf16> to vector<8x8xbf16>
    %43 = vector.extract_strided_slice %1 {offsets = [0, 38], sizes = [8, 182], strides = [1, 1]} : vector<8x220xbf16> to vector<8x182xbf16>
    %cst_29 = arith.constant dense<0.000000e+00> : vector<8x182xf32>
    %44 = tpu.matmul %42, %43, %cst_29 {dimension_numbers = #tpu.dot_dimension_numbers<[1], [0], [0], [1], [0, 0, 1, 1], [], []>} : vector<8x8xbf16>, vector<8x182xbf16>, vector<8x182xf32> -> vector<8x182xf32>
    %45 = arith.addf %40, %44 : vector<8x182xf32>
    %c0_30 = arith.constant 0 : index
    %c0_31 = arith.constant 0 : index
    %46 = vector.load %arg4[%c0_30, %c0_31] : memref<8x1xf32, #tpu.memory_space<vmem>>, vector<8x1xf32>
    %47 = vector.broadcast %46 : vector<8x1xf32> to vector<8x182xf32>
    %48 = arith.addf %45, %47 : vector<8x182xf32>
    %cst_32 = arith.constant 0.000000e+00 : f32
    %49 = vector.broadcast %cst_32 : f32 to vector<8x182xf32>
    %50 = arith.maximumf %48, %49 : vector<8x182xf32>
    %c0_33 = arith.constant 0 : index
    %c0_34 = arith.constant 0 : index
    %c0_35 = arith.constant 0 : index
    %51 = vector.load %arg7[%c0_33, %c0_34, %c0_35] : memref<1x1x182xf32, #tpu.memory_space<vmem>>, vector<1x1x182xf32>
    %52 = vector.shape_cast %51 : vector<1x1x182xf32> to vector<1x182xf32>
    %53 = vector.broadcast %52 : vector<1x182xf32> to vector<8x182xf32>
    %54 = arith.mulf %50, %53 : vector<8x182xf32>
    %55 = arith.truncf %54 : vector<8x182xf32> to vector<8x182xbf16>
    %c0_36 = arith.constant 0 : index
    %c0_37 = arith.constant 0 : index
    %c0_38 = arith.constant 0 : index
    %56 = vector.load %arg5[%c0_36, %c0_37, %c0_38] : memref<9x8x8xbf16, #tpu.memory_space<vmem>>, vector<1x8x8xbf16>
    %57 = vector.shape_cast %56 : vector<1x8x8xbf16> to vector<8x8xbf16>
    %58 = vector.extract_strided_slice %55 {offsets = [0, 0], sizes = [8, 144], strides = [1, 1]} : vector<8x182xbf16> to vector<8x144xbf16>
    %cst_39 = arith.constant dense<0.000000e+00> : vector<8x144xf32>
    %59 = tpu.matmul %57, %58, %cst_39 {dimension_numbers = #tpu.dot_dimension_numbers<[1], [0], [0], [1], [0, 0, 1, 1], [], []>} : vector<8x8xbf16>, vector<8x144xbf16>, vector<8x144xf32> -> vector<8x144xf32>
    %c1_40 = arith.constant 1 : index
    %c0_41 = arith.constant 0 : index
    %c0_42 = arith.constant 0 : index
    %60 = vector.load %arg5[%c1_40, %c0_41, %c0_42] : memref<9x8x8xbf16, #tpu.memory_space<vmem>>, vector<1x8x8xbf16>
    %61 = vector.shape_cast %60 : vector<1x8x8xbf16> to vector<8x8xbf16>
    %62 = vector.extract_strided_slice %55 {offsets = [0, 1], sizes = [8, 144], strides = [1, 1]} : vector<8x182xbf16> to vector<8x144xbf16>
    %cst_43 = arith.constant dense<0.000000e+00> : vector<8x144xf32>
    %63 = tpu.matmul %61, %62, %cst_43 {dimension_numbers = #tpu.dot_dimension_numbers<[1], [0], [0], [1], [0, 0, 1, 1], [], []>} : vector<8x8xbf16>, vector<8x144xbf16>, vector<8x144xf32> -> vector<8x144xf32>
    %64 = arith.addf %59, %63 : vector<8x144xf32>
    %c2_44 = arith.constant 2 : index
    %c0_45 = arith.constant 0 : index
    %c0_46 = arith.constant 0 : index
    %65 = vector.load %arg5[%c2_44, %c0_45, %c0_46] : memref<9x8x8xbf16, #tpu.memory_space<vmem>>, vector<1x8x8xbf16>
    %66 = vector.shape_cast %65 : vector<1x8x8xbf16> to vector<8x8xbf16>
    %67 = vector.extract_strided_slice %55 {offsets = [0, 2], sizes = [8, 144], strides = [1, 1]} : vector<8x182xbf16> to vector<8x144xbf16>
    %cst_47 = arith.constant dense<0.000000e+00> : vector<8x144xf32>
    %68 = tpu.matmul %66, %67, %cst_47 {dimension_numbers = #tpu.dot_dimension_numbers<[1], [0], [0], [1], [0, 0, 1, 1], [], []>} : vector<8x8xbf16>, vector<8x144xbf16>, vector<8x144xf32> -> vector<8x144xf32>
    %69 = arith.addf %64, %68 : vector<8x144xf32>
    %c3_48 = arith.constant 3 : index
    %c0_49 = arith.constant 0 : index
    %c0_50 = arith.constant 0 : index
    %70 = vector.load %arg5[%c3_48, %c0_49, %c0_50] : memref<9x8x8xbf16, #tpu.memory_space<vmem>>, vector<1x8x8xbf16>
    %71 = vector.shape_cast %70 : vector<1x8x8xbf16> to vector<8x8xbf16>
    %72 = vector.extract_strided_slice %55 {offsets = [0, 18], sizes = [8, 144], strides = [1, 1]} : vector<8x182xbf16> to vector<8x144xbf16>
    %cst_51 = arith.constant dense<0.000000e+00> : vector<8x144xf32>
    %73 = tpu.matmul %71, %72, %cst_51 {dimension_numbers = #tpu.dot_dimension_numbers<[1], [0], [0], [1], [0, 0, 1, 1], [], []>} : vector<8x8xbf16>, vector<8x144xbf16>, vector<8x144xf32> -> vector<8x144xf32>
    %74 = arith.addf %69, %73 : vector<8x144xf32>
    %c4_52 = arith.constant 4 : index
    %c0_53 = arith.constant 0 : index
    %c0_54 = arith.constant 0 : index
    %75 = vector.load %arg5[%c4_52, %c0_53, %c0_54] : memref<9x8x8xbf16, #tpu.memory_space<vmem>>, vector<1x8x8xbf16>
    %76 = vector.shape_cast %75 : vector<1x8x8xbf16> to vector<8x8xbf16>
    %77 = vector.extract_strided_slice %55 {offsets = [0, 19], sizes = [8, 144], strides = [1, 1]} : vector<8x182xbf16> to vector<8x144xbf16>
    %cst_55 = arith.constant dense<0.000000e+00> : vector<8x144xf32>
    %78 = tpu.matmul %76, %77, %cst_55 {dimension_numbers = #tpu.dot_dimension_numbers<[1], [0], [0], [1], [0, 0, 1, 1], [], []>} : vector<8x8xbf16>, vector<8x144xbf16>, vector<8x144xf32> -> vector<8x144xf32>
    %79 = arith.addf %74, %78 : vector<8x144xf32>
    %c5_56 = arith.constant 5 : index
    %c0_57 = arith.constant 0 : index
    %c0_58 = arith.constant 0 : index
    %80 = vector.load %arg5[%c5_56, %c0_57, %c0_58] : memref<9x8x8xbf16, #tpu.memory_space<vmem>>, vector<1x8x8xbf16>
    %81 = vector.shape_cast %80 : vector<1x8x8xbf16> to vector<8x8xbf16>
    %82 = vector.extract_strided_slice %55 {offsets = [0, 20], sizes = [8, 144], strides = [1, 1]} : vector<8x182xbf16> to vector<8x144xbf16>
    %cst_59 = arith.constant dense<0.000000e+00> : vector<8x144xf32>
    %83 = tpu.matmul %81, %82, %cst_59 {dimension_numbers = #tpu.dot_dimension_numbers<[1], [0], [0], [1], [0, 0, 1, 1], [], []>} : vector<8x8xbf16>, vector<8x144xbf16>, vector<8x144xf32> -> vector<8x144xf32>
    %84 = arith.addf %79, %83 : vector<8x144xf32>
    %c6_60 = arith.constant 6 : index
    %c0_61 = arith.constant 0 : index
    %c0_62 = arith.constant 0 : index
    %85 = vector.load %arg5[%c6_60, %c0_61, %c0_62] : memref<9x8x8xbf16, #tpu.memory_space<vmem>>, vector<1x8x8xbf16>
    %86 = vector.shape_cast %85 : vector<1x8x8xbf16> to vector<8x8xbf16>
    %87 = vector.extract_strided_slice %55 {offsets = [0, 36], sizes = [8, 144], strides = [1, 1]} : vector<8x182xbf16> to vector<8x144xbf16>
    %cst_63 = arith.constant dense<0.000000e+00> : vector<8x144xf32>
    %88 = tpu.matmul %86, %87, %cst_63 {dimension_numbers = #tpu.dot_dimension_numbers<[1], [0], [0], [1], [0, 0, 1, 1], [], []>} : vector<8x8xbf16>, vector<8x144xbf16>, vector<8x144xf32> -> vector<8x144xf32>
    %89 = arith.addf %84, %88 : vector<8x144xf32>
    %c7_64 = arith.constant 7 : index
    %c0_65 = arith.constant 0 : index
    %c0_66 = arith.constant 0 : index
    %90 = vector.load %arg5[%c7_64, %c0_65, %c0_66] : memref<9x8x8xbf16, #tpu.memory_space<vmem>>, vector<1x8x8xbf16>
    %91 = vector.shape_cast %90 : vector<1x8x8xbf16> to vector<8x8xbf16>
    %92 = vector.extract_strided_slice %55 {offsets = [0, 37], sizes = [8, 144], strides = [1, 1]} : vector<8x182xbf16> to vector<8x144xbf16>
    %cst_67 = arith.constant dense<0.000000e+00> : vector<8x144xf32>
    %93 = tpu.matmul %91, %92, %cst_67 {dimension_numbers = #tpu.dot_dimension_numbers<[1], [0], [0], [1], [0, 0, 1, 1], [], []>} : vector<8x8xbf16>, vector<8x144xbf16>, vector<8x144xf32> -> vector<8x144xf32>
    %94 = arith.addf %89, %93 : vector<8x144xf32>
    %c8_68 = arith.constant 8 : index
    %c0_69 = arith.constant 0 : index
    %c0_70 = arith.constant 0 : index
    %95 = vector.load %arg5[%c8_68, %c0_69, %c0_70] : memref<9x8x8xbf16, #tpu.memory_space<vmem>>, vector<1x8x8xbf16>
    %96 = vector.shape_cast %95 : vector<1x8x8xbf16> to vector<8x8xbf16>
    %97 = vector.extract_strided_slice %55 {offsets = [0, 38], sizes = [8, 144], strides = [1, 1]} : vector<8x182xbf16> to vector<8x144xbf16>
    %cst_71 = arith.constant dense<0.000000e+00> : vector<8x144xf32>
    %98 = tpu.matmul %96, %97, %cst_71 {dimension_numbers = #tpu.dot_dimension_numbers<[1], [0], [0], [1], [0, 0, 1, 1], [], []>} : vector<8x8xbf16>, vector<8x144xbf16>, vector<8x144xf32> -> vector<8x144xf32>
    %99 = arith.addf %94, %98 : vector<8x144xf32>
    %100 = vector.extract_strided_slice %1 {offsets = [0, 38], sizes = [8, 144], strides = [1, 1]} : vector<8x220xbf16> to vector<8x144xbf16>
    %101 = arith.extf %100 : vector<8x144xbf16> to vector<8x144xf32>
    %c0_72 = arith.constant 0 : index
    %c0_73 = arith.constant 0 : index
    %102 = vector.load %arg6[%c0_72, %c0_73] : memref<8x1xf32, #tpu.memory_space<vmem>>, vector<8x1xf32>
    %103 = vector.broadcast %102 : vector<8x1xf32> to vector<8x144xf32>
    %104 = arith.addf %99, %103 : vector<8x144xf32>
    %105 = arith.addf %104, %101 : vector<8x144xf32>
    %cst_74 = arith.constant 0.000000e+00 : f32
    %106 = vector.broadcast %cst_74 : f32 to vector<8x144xf32>
    %107 = arith.maximumf %105, %106 : vector<8x144xf32>
    %c0_75 = arith.constant 0 : index
    %c0_76 = arith.constant 0 : index
    %c0_77 = arith.constant 0 : index
    %c0_78 = arith.constant 0 : index
    %108 = vector.load %arg8[%c0_75, %c0_76, %c0_77, %c0_78] : memref<1x1x8x144xf32, #tpu.memory_space<vmem>>, vector<1x1x8x144xf32>
    %109 = vector.shape_cast %108 : vector<1x1x8x144xf32> to vector<8x144xf32>
    %110 = vector.shape_cast %107 : vector<8x144xf32> to vector<1x1x8x144xf32>
    tpu.vector_store %arg8[%c0_75, %c0_76, %c0_77, %c0_78], %110 {strides = array<i32>} : memref<1x1x8x144xf32, #tpu.memory_space<vmem>>, vector<1x1x8x144xf32>,
    return
  }
  func.func @transform_0(%arg0: i32, %arg1: i32) -> (i32, i32, i32, i32) {
    %c0_i32 = arith.constant 0 : i32
    %c0_i32_0 = arith.constant 0 : i32
    %c0_i32_1 = arith.constant 0 : i32
    return %arg0, %arg1, %c0_i32, %c0_i32_0 : i32, i32, i32, i32
  }
  func.func @transform_1(%arg0: i32, %arg1: i32) -> (i32, i32, i32) {
    %c0_i32 = arith.constant 0 : i32
    %c0_i32_0 = arith.constant 0 : i32
    %c0_i32_1 = arith.constant 0 : i32
    %c0_i32_2 = arith.constant 0 : i32
    return %c0_i32, %c0_i32_0, %c0_i32_1 : i32, i32, i32
  }
  func.func @transform_2(%arg0: i32, %arg1: i32) -> (i32, i32) {
    %c0_i32 = arith.constant 0 : i32
    %c0_i32_0 = arith.constant 0 : i32
    %c0_i32_1 = arith.constant 0 : i32
    return %c0_i32, %c0_i32_0 : i32, i32
  }
  func.func @transform_3(%arg0: i32, %arg1: i32) -> (i32, i32, i32) {
    %c0_i32 = arith.constant 0 : i32
    %c0_i32_0 = arith.constant 0 : i32
    %c0_i32_1 = arith.constant 0 : i32
    %c0_i32_2 = arith.constant 0 : i32
    return %c0_i32, %c0_i32_0, %c0_i32_1 : i32, i32, i32
  }
  func.func @transform_4(%arg0: i32, %arg1: i32) -> (i32, i32) {
    %c0_i32 = arith.constant 0 : i32
    %c0_i32_0 = arith.constant 0 : i32
    %c0_i32_1 = arith.constant 0 : i32
    return %c0_i32, %c0_i32_0 : i32, i32
  }
  func.func @transform_5(%arg0: i32, %arg1: i32) -> (i32, i32, i32) {
    %c0_i32 = arith.constant 0 : i32
    %c0_i32_0 = arith.constant 0 : i32
    %c0_i32_1 = arith.constant 0 : i32
    return %arg1, %c0_i32, %c0_i32_0 : i32, i32, i32
  }
  func.func @transform_6(%arg0: i32, %arg1: i32) -> (i32, i32, i32, i32) {
    %c0_i32 = arith.constant 0 : i32
    %c0_i32_0 = arith.constant 0 : i32
    %c0_i32_1 = arith.constant 0 : i32
    return %arg0, %arg1, %c0_i32, %c0_i32_0 : i32, i32, i32, i32
  }
}

</mosaic_0001>

<llo_original>
// kernel: tpu_custom_call.1
$region0: #{tpu_custom_call.1}
  #allocation0 [shape = 'u32[]', space=smem, size = 0x4, offset = 0x4, fixed_abs, tag = 'smem constant byte address 0x4 - core index']
  #allocation1 [shape = 'u32[144,128]{1,0:T(1,128)}', space=vmem, size = 0x12000, scoped, tag = 'internal scratch']
  %s0 = inlined_call_operand.vmem [shape: bf16[2,2,8,220], index: 0, kind: input, shape index: {}]
  %s1 = inlined_call_operand.vmem [shape: bf16[9,8,8], index: 1, kind: input, shape index: {}]
  %s2 = inlined_call_operand.vmem [shape: f32[8,1], index: 2, kind: input, shape index: {}]
  %s3 = inlined_call_operand.vmem [shape: bf16[9,8,8], index: 3, kind: input, shape index: {}]
  %s4 = inlined_call_operand.vmem [shape: f32[8,1], index: 4, kind: input, shape index: {}]
  %s5 = inlined_call_operand.vmem [shape: f32[2,1,182], index: 5, kind: input, shape index: {}]
  %s6 = inlined_call_operand.hbm [shape: f32[2,2,8,144], index: 6, kind: output, shape index: {}]
  %s7 = sld [smem:[#allocation0]]
  $region57: #{tpu_custom_call.1} parent=0
    _
  %s9 = ssub.s32 1, %s7
  %s10 = scalar_select 0, %s9, %s7
  $region1: #{tpu_custom_call.1} parent=0
    #allocation2 [shape = 'u8[16384]{0}', space=vmem, size = 0x4000, scoped, tag = 'output window, operand 0']
    #allocation3 [shape = 's32[2]{0}', space=sflag, size = 0x8, scoped, tag = 'scoped memory for tpu_custom_call.1']
    %11 = vsyncpa [#allocation3], 0
    %s12 = scalar_lea.sflag [#allocation3], 1
    %13 = vsyncpa %s12, 0
    loop: start=0, step=1, limit=6
    $region2: #{tpu_custom_call.1} parent=1 // loop_pre_header
      _
    $region3: #{tpu_custom_call.1} parent=1 // loop_header
      %s15 = sphi 0, %s19
      %p16 = scmp.ge.s32.totalorder %s15, 6
      %s22 = sphi 0, %s34
      %s23 = sphi 0, %s30
      %s24 = sphi 0, %s22
      %s25 = sphi 0, %s23
      %s26 = sphi 0, %s24
      %s27 = sphi 0, %s25
      %s39 = sphi 0, %s41
      %s42 = sphi 0, %s39
      %s43 = sphi 0, %s42
      %s59 = sphi 0, %s43
      %s63 = sphi 0, %s63
      %s65 = sphi 0, %s63
      %s66 = sphi 0, %s65
      %s80 = sphi 0, %s66
      %s84 = sphi 0, %s84
      %s86 = sphi 0, %s84
      %s87 = sphi 0, %s86
      %s101 = sphi 0, %s87
      %s105 = sphi 0, %s105
      %s107 = sphi 0, %s105
      %s108 = sphi 0, %s107
      %s122 = sphi 0, %s108
      %s126 = sphi 0, %s126
      %s128 = sphi 0, %s126
      %s129 = sphi 0, %s128
      %s143 = sphi 0, %s129
      %s149 = sphi 0, %s151
      %s152 = sphi 0, %s149
      %s153 = sphi 0, %s152
      %s169 = sphi 0, %s153
      %s177 = sphi 0, %s179
      %s180 = sphi 0, %s177
      %s181 = sphi 0, %s180
      %s197 = sphi 0, %s181
    $region4: #{tpu_custom_call.1} parent=1 // loop_header_branch
      %18 = sbr.rel (%p16) target = $region8
    $region5: #{tpu_custom_call.1} parent=1 // loop_body
      %s20 = ssub.s32 %s15, 1
      %s21 = ssub.s32 %s15, 2
      %s28 = sadd.s32 1, %s23
      %p29 = scmp.ge.s32.totalorder %s28, 2
      %s30 = scalar_select %p29, 0, %s28
      %s31 = sadd.s32 1, %s22
      %s32 = scalar_select %p29, %s31, %s22
      %p33 = scmp.ge.s32.totalorder %s32, 2
      %s34 = scalar_select %p33, 0, %s32
      %s35 = ssub.s32 %s22, %s34
      %s36 = ssub.s32 %s23, %s30
      %s37 = sor.u32 %s35, %s36
      %p38 = scmp.eq.s32.totalorder %s37, 0
      %s40 = sadd.s32 %s39, 1
      %s41 = scalar_select %p38, %s39, %s40
      %p44 = pneg %p38
      %p45 = scmp.eq.s32.totalorder %s15, 3
      %p46 = por %p44, %p45
      %p47 = scmp.ne.s32.totalorder %s39, %s42
      %p48 = scmp.eq.s32.totalorder %s15, 0
      %p49 = por %p47, %p48
      %p50 = scmp.ne.s32.totalorder %s39, %s42
      %p51 = scmp.eq.s32.totalorder %s20, 3
      %p52 = por %p50, %p51
      %p53 = scmp.ne.s32.totalorder %s42, %s43
      %p54 = scmp.eq.s32.totalorder %s20, 0
      %p55 = por %p53, %p54
      %p56 = scmp.ne.s32.totalorder %s42, %s43
      %p57 = scmp.eq.s32.totalorder %s21, 3
      %p58 = por %p56, %p57
      %p60 = scmp.ne.s32.totalorder %s43, %s59
      %p61 = scmp.eq.s32.totalorder %s21, 0
      %p62 = por %p60, %p61
      %s64 = sadd.s32 %s63, 1
      %p67 = scmp.eq.s32.totalorder %s15, 3
      %p68 = scmp.ne.s32.totalorder %s63, %s65
      %p69 = scmp.eq.s32.totalorder %s15, 0
      %p70 = por %p68, %p69
      %p71 = scmp.ne.s32.totalorder %s63, %s65
      %p72 = scmp.eq.s32.totalorder %s20, 3
      %p73 = por %p71, %p72
      %p74 = scmp.ne.s32.totalorder %s65, %s66
      %p75 = scmp.eq.s32.totalorder %s20, 0
      %p76 = por %p74, %p75
      %p77 = scmp.ne.s32.totalorder %s65, %s66
      %p78 = scmp.eq.s32.totalorder %s21, 3
      %p79 = por %p77, %p78
      %p81 = scmp.ne.s32.totalorder %s66, %s80
      %p82 = scmp.eq.s32.totalorder %s21, 0
      %p83 = por %p81, %p82
      %s85 = sadd.s32 %s84, 1
      %p88 = scmp.eq.s32.totalorder %s15, 3
      %p89 = scmp.ne.s32.totalorder %s84, %s86
      %p90 = scmp.eq.s32.totalorder %s15, 0
      %p91 = por %p89, %p90
      %p92 = scmp.ne.s32.totalorder %s84, %s86
      %p93 = scmp.eq.s32.totalorder %s20, 3
      %p94 = por %p92, %p93
      %p95 = scmp.ne.s32.totalorder %s86, %s87
      %p96 = scmp.eq.s32.totalorder %s20, 0
      %p97 = por %p95, %p96
      %p98 = scmp.ne.s32.totalorder %s86, %s87
      %p99 = scmp.eq.s32.totalorder %s21, 3
      %p100 = por %p98, %p99
      %p102 = scmp.ne.s32.totalorder %s87, %s101
      %p103 = scmp.eq.s32.totalorder %s21, 0
      %p104 = por %p102, %p103
      %s106 = sadd.s32 %s105, 1
      %p109 = scmp.eq.s32.totalorder %s15, 3
      %p110 = scmp.ne.s32.totalorder %s105, %s107
      %p111 = scmp.eq.s32.totalorder %s15, 0
      %p112 = por %p110, %p111
      %p113 = scmp.ne.s32.totalorder %s105, %s107
      %p114 = scmp.eq.s32.totalorder %s20, 3
      %p115 = por %p113, %p114
      %p116 = scmp.ne.s32.totalorder %s107, %s108
      %p117 = scmp.eq.s32.totalorder %s20, 0
      %p118 = por %p116, %p117
      %p119 = scmp.ne.s32.totalorder %s107, %s108
      %p120 = scmp.eq.s32.totalorder %s21, 3
      %p121 = por %p119, %p120
      %p123 = scmp.ne.s32.totalorder %s108, %s122
      %p124 = scmp.eq.s32.totalorder %s21, 0
      %p125 = por %p123, %p124
      %s127 = sadd.s32 %s126, 1
      %p130 = scmp.eq.s32.totalorder %s15, 3
      %p131 = scmp.ne.s32.totalorder %s126, %s128
      %p132 = scmp.eq.s32.totalorder %s15, 0
      %p133 = por %p131, %p132
      %p134 = scmp.ne.s32.totalorder %s126, %s128
      %p135 = scmp.eq.s32.totalorder %s20, 3
      %p136 = por %p134, %p135
      %p137 = scmp.ne.s32.totalorder %s128, %s129
      %p138 = scmp.eq.s32.totalorder %s20, 0
      %p139 = por %p137, %p138
      %p140 = scmp.ne.s32.totalorder %s128, %s129
      %p141 = scmp.eq.s32.totalorder %s21, 3
      %p142 = por %p140, %p141
      %p144 = scmp.ne.s32.totalorder %s129, %s143
      %p145 = scmp.eq.s32.totalorder %s21, 0
      %p146 = por %p144, %p145
      %s147 = ssub.s32 %s23, %s30
      %p148 = scmp.eq.s32.totalorder %s147, 0
      %s150 = sadd.s32 %s149, 1
      %s151 = scalar_select %p148, %s149, %s150
      %p154 = pneg %p148
      %p155 = scmp.eq.s32.totalorder %s15, 3
      %p156 = por %p154, %p155
      %p157 = scmp.ne.s32.totalorder %s149, %s152
      %p158 = scmp.eq.s32.totalorder %s15, 0
      %p159 = por %p157, %p158
      %p160 = scmp.ne.s32.totalorder %s149, %s152
      %p161 = scmp.eq.s32.totalorder %s20, 3
      %p162 = por %p160, %p161
      %p163 = scmp.ne.s32.totalorder %s152, %s153
      %p164 = scmp.eq.s32.totalorder %s20, 0
      %p165 = por %p163, %p164
      %p166 = scmp.ne.s32.totalorder %s152, %s153
      %p167 = scmp.eq.s32.totalorder %s21, 3
      %p168 = por %p166, %p167
      %p170 = scmp.ne.s32.totalorder %s153, %s169
      %p171 = scmp.eq.s32.totalorder %s21, 0
      %p172 = por %p170, %p171
      %s173 = ssub.s32 %s22, %s34
      %s174 = ssub.s32 %s23, %s30
      %s175 = sor.u32 %s173, %s174
      %p176 = scmp.eq.s32.totalorder %s175, 0
      %s178 = sadd.s32 %s177, 1
      %s179 = scalar_select %p176, %s177, %s178
      %p182 = pneg %p176
      %p183 = scmp.eq.s32.totalorder %s15, 3
      %p184 = por %p182, %p183
      %p185 = scmp.ne.s32.totalorder %s177, %s180
      %p186 = scmp.eq.s32.totalorder %s15, 0
      %p187 = por %p185, %p186
      %p188 = scmp.ne.s32.totalorder %s177, %s180
      %p189 = scmp.eq.s32.totalorder %s20, 3
      %p190 = por %p188, %p189
      %p191 = scmp.ne.s32.totalorder %s180, %s181
      %p192 = scmp.eq.s32.totalorder %s20, 0
      %p193 = por %p191, %p192
      %p194 = scmp.ne.s32.totalorder %s180, %s181
      %p195 = scmp.eq.s32.totalorder %s21, 3
      %p196 = por %p194, %p195
      %p198 = scmp.ne.s32.totalorder %s181, %s197
      %p199 = scmp.eq.s32.totalorder %s21, 0
      %p200 = por %p198, %p199
      %p201 = scmp.le.s32.totalorder 1, %s15
      %p202 = scmp.lt.s32.totalorder %s15, 5
      %p203 = pnand %p201, %p202
      %p204 = pneg %p203
      // Predicated region
      $region9: #{tpu_custom_call.1} parent=5 // pred_check
        _
      $region10: #{tpu_custom_call.1} parent=5 // pred_check_branch
        %206 = sbr.rel (%p203) target = $region12
      $region11: #{tpu_custom_call.1} parent=5 // pred_region
        %s207 = ssub.s32 %s15, 1
        // Predicated region
        $region13: #{tpu_custom_call.1} parent=11 // pred_check
          %p208 = pneg %p76
        $region14: #{tpu_custom_call.1} parent=11 // pred_check_branch
          %210 = sbr.rel (%p208) target = $region16
        $region15: #{tpu_custom_call.1} parent=11 // pred_region
          _
        $region16: #{tpu_custom_call.1} parent=11 // pred_fallthru
          _
        // Predicated region
        $region17: #{tpu_custom_call.1} parent=11 // pred_check
          %p211 = pneg %p97
        $region18: #{tpu_custom_call.1} parent=11 // pred_check_branch
          %213 = sbr.rel (%p211) target = $region20
        $region19: #{tpu_custom_call.1} parent=11 // pred_region
          _
        $region20: #{tpu_custom_call.1} parent=11 // pred_fallthru
          _
        // Predicated region
        $region21: #{tpu_custom_call.1} parent=11 // pred_check
          %p214 = pneg %p118
        $region22: #{tpu_custom_call.1} parent=11 // pred_check_branch
          %216 = sbr.rel (%p214) target = $region24
        $region23: #{tpu_custom_call.1} parent=11 // pred_region
          _
        $region24: #{tpu_custom_call.1} parent=11 // pred_fallthru
          _
        // Predicated region
        $region25: #{tpu_custom_call.1} parent=11 // pred_check
          %p217 = pneg %p139
        $region26: #{tpu_custom_call.1} parent=11 // pred_check_branch
          %219 = sbr.rel (%p217) target = $region28
        $region27: #{tpu_custom_call.1} parent=11 // pred_region
          _
        $region28: #{tpu_custom_call.1} parent=11 // pred_fallthru
          _
      $region12: #{tpu_custom_call.1} parent=5 // pred_fallthru
        _
      %p220 = scmp.lt.s32.totalorder %s15, 4
      // Predicated region
      $region29: #{tpu_custom_call.1} parent=5 // pred_check
        %p221 = pneg %p220
      $region30: #{tpu_custom_call.1} parent=5 // pred_check_branch
        %223 = sbr.rel (%p221) target = $region32
      $region31: #{tpu_custom_call.1} parent=5 // pred_region
        // Predicated region
        $region33: #{tpu_custom_call.1} parent=31 // pred_check
          %p224 = pneg %p49
        $region34: #{tpu_custom_call.1} parent=31 // pred_check_branch
          %226 = sbr.rel (%p224) target = $region36
        $region35: #{tpu_custom_call.1} parent=31 // pred_region
          %p227 = scmp.lt.s32.totalorder %s22, 1
          %s228 = scalar_select %p227, %s22, 1
          %p229 = scmp.lt.s32.totalorder %s23, 1
          %s230 = scalar_select %p229, %s23, 1
          %s231 = smul.addr %s230, 2
          %s232 = smul.addr %s228, 4
          %s233 = sadd.s32 %s231, %s232
          %s234 = smul.addr %s233, 4
          %s235 = scalar_lea.vmem %s0, %s234
        $region36: #{tpu_custom_call.1} parent=31 // pred_fallthru
          _
        // Predicated region
        $region37: #{tpu_custom_call.1} parent=31 // pred_check
          %p236 = pneg %p159
        $region38: #{tpu_custom_call.1} parent=31 // pred_check_branch
          %238 = sbr.rel (%p236) target = $region40
        $region39: #{tpu_custom_call.1} parent=31 // pred_region
          %p239 = scmp.lt.s32.totalorder %s23, 1
          %s240 = scalar_select %p239, %s23, 1
          %s241 = smul.addr %s240, 2
          %s242 = scalar_lea.vmem %s5, %s241
        $region40: #{tpu_custom_call.1} parent=31 // pred_fallthru
          _
      $region32: #{tpu_custom_call.1} parent=5 // pred_fallthru
        _
      %p243 = scmp.le.s32.totalorder 1, %s15
      %p244 = scmp.lt.s32.totalorder %s15, 5
      %p245 = pnand %p243, %p244
      %p246 = pneg %p245
      // Predicated region
      $region41: #{tpu_custom_call.1} parent=5 // pred_check
        _
      $region42: #{tpu_custom_call.1} parent=5 // pred_check_branch
        %248 = sbr.rel (%p245) target = $region44
      $region43: #{tpu_custom_call.1} parent=5 // pred_region
        %s249 = ssub.s32 %s15, 1
        %p250 = scmp.lt.s32.totalorder %s24, 1
        %s251 = scalar_select %p250, %s24, 1
        %p252 = scmp.lt.s32.totalorder %s25, 1
        %s253 = scalar_select %p252, %s25, 1
        %s254 = smul.addr %s253, 2
        %s255 = smul.addr %s251, 4
        %s256 = sadd.s32 %s254, %s255
        %s257 = smul.addr %s256, 4
        %s258 = scalar_lea.vmem %s0, %s257
        %p259 = pneg %p55
        %p260 = pneg %p52
        %p261 = pneg %p76
        %p262 = pneg %p73
        %p263 = pneg %p97
        %p264 = pneg %p94
        %p265 = pneg %p118
        %p266 = pneg %p115
        %p267 = pneg %p139
        %p268 = pneg %p136
        %p269 = scmp.lt.s32.totalorder %s25, 1
        %s270 = scalar_select %p269, %s25, 1
        %s271 = smul.addr %s270, 2
        %s272 = scalar_lea.vmem %s5, %s271
        %p273 = pneg %p165
        %p274 = pneg %p162
        %p275 = pneg %p193
        %p276 = pneg %p190
        %s277 = sand.u32 %s180, 1
        %s278 = scalar_lea.sflag [#allocation3], %s277
        %s279 = sand.u32 %s180, 1
        %s280 = smul.addr %s279, 16
        %s281 = scalar_lea.vmem [#allocation2], %s280
        %p282 = scmp.lt.s32.totalorder %s24, 1
        %s283 = scalar_select %p282, %s24, 1
        %p284 = scmp.lt.s32.totalorder %s25, 1
        %s285 = scalar_select %p284, %s25, 1
        %s286 = smul.addr %s285, 2
        %s287 = smul.addr %s283, 4
        %s288 = sadd.s32 %s286, %s287
        %s289 = smul.addr %s288, 4
        %s290 = scalar_lea.vmem %s0, %s289
        %p291 = scmp.lt.s32.totalorder %s25, 1
        %s292 = scalar_select %p291, %s25, 1
        %s293 = smul.addr %s292, 2
        %s294 = scalar_lea.vmem %s5, %s293
        %v296 = vld [vmem:[%s290] sm:$0xff]
        %v297 = vld [vmem:[%s1] sm:$0xf]
        %s298 = scalar_lea.vmem %s1, 4
        %v299 = vld [vmem:[%s298] sm:$0xf]
        %v301 = vunpack.c.l.b16 %v296
        %v302 = vunpack.c.h.b16 %v296
        %v303 = vpack.c.b16 %v301, %v301
        %v304 = vpack.c.b16 %v302, %v302
        %305 = vrot.lane.b32.xlu0 %v303, 127
        %v306 = vpop.permute.xlu0 %305
        %307 = vrot.lane.b32.xlu0 %v304, 127
        %v308 = vpop.permute.xlu0 %307
        %vm309 = vcmask 1039360
        %v310 = vsel %vm309, %v306, %v308
        %vm311 = vcmask 64512
        %v313 = vsel %vm311, %v299, 0
        %vm315 = vcmask 1043456
        %v317 = vsel %vm315, %v310, 0
        %v320 = vsel %vm315, %v308, 0
        %322 = vmatprep.subr.bf16.mxu0 0
        %323 = vmatpush1.bf16.msra.mxu0 0
        %324 = vmatprep.subr.bf16.mxu0 0
        %325 = vmatpush1.bf16.msra.mxu0 0
        %326 = vmatprep.subr.bf16.mxu0 0
        %327 = vmatpush1.bf16.msra.mxu0 0
        %328 = vmatprep.subr.bf16.mxu0 0
        %329 = vmatpush1.bf16.msra.mxu0 0
        %330 = vmatprep.subr.bf16.mxu0 0
        %331 = vmatpush1.bf16.msra.mxu0 0
        %332 = vmatprep.subr.bf16.mxu0 0
        %333 = vmatpush1.bf16.msra.mxu0 0
        %334 = vmatprep.subr.bf16.mxu0 0
        %335 = vmatpush1.bf16.msra.mxu0 0
        %336 = vmatprep.subr.bf16.mxu0 %v320
        %337 = vmatpush1.bf16.msra.mxu0 %v317
        %338 = vmatprep.subr.bf16.mxu0 0
        %339 = vmatpush2.bf16.msra.mxu0 0
        %340 = vmatprep.subr.bf16.mxu0 0
        %341 = vmatpush2.bf16.msra.mxu0 0
        %342 = vmatprep.subr.bf16.mxu0 0
        %343 = vmatpush2.bf16.msra.mxu0 0
        %344 = vmatprep.subr.bf16.mxu0 0
        %345 = vmatpush2.bf16.msra.mxu0 0
        %346 = vmatprep.subr.bf16.mxu0 0
        %347 = vmatpush2.bf16.msra.mxu0 0
        %348 = vmatprep.subr.bf16.mxu0 0
        %349 = vmatpush2.bf16.msra.mxu0 0
        %350 = vmatprep.subr.bf16.mxu0 0
        %351 = vmatpush2.bf16.msra.mxu0 0
        %352 = vmatprep.subr.bf16.mxu0 0
        %353 = vmatpush2.bf16.msra.mxu0 0
        %354 = vmatprep.mubr.bf16.mxu0 0
        %355 = vmatmul.mubr.bf16.gmra.mxu0 %v313
        %v356 = vpop.f32.mrf.mxu0
        %v357 = vadd.f32 0.0, %v356
        %v358 = vpop.f32.mrf.mxu0
        %v359 = vadd.f32 0.0, %v358
        %v360 = vpop.f32.mrf.mxu0
        %v361 = vpop.f32.mrf.mxu0
        %362 = vdwg.mxu0
        %v364 = vsel %vm311, %v297, 0
        %v367 = vsel %vm315, %v303, 0
        %v370 = vsel %vm315, %v304, 0
        %372 = vmatprep.subr.bf16.mxu0 0
        %373 = vmatpush1.bf16.msra.mxu0 0
        %374 = vmatprep.subr.bf16.mxu0 0
        %375 = vmatpush1.bf16.msra.mxu0 0
        %376 = vmatprep.subr.bf16.mxu0 0
        %377 = vmatpush1.bf16.msra.mxu0 0
        %378 = vmatprep.subr.bf16.mxu0 0
        %379 = vmatpush1.bf16.msra.mxu0 0
        %380 = vmatprep.subr.bf16.mxu0 0
        %381 = vmatpush1.bf16.msra.mxu0 0
        %382 = vmatprep.subr.bf16.mxu0 0
        %383 = vmatpush1.bf16.msra.mxu0 0
        %384 = vmatprep.subr.bf16.mxu0 0
        %385 = vmatpush1.bf16.msra.mxu0 0
        %386 = vmatprep.subr.bf16.mxu0 %v370
        %387 = vmatpush1.bf16.msra.mxu0 %v367
        %388 = vmatprep.subr.bf16.mxu0 0
        %389 = vmatpush2.bf16.msra.mxu0 0
        %390 = vmatprep.subr.bf16.mxu0 0
        %391 = vmatpush2.bf16.msra.mxu0 0
        %392 = vmatprep.subr.bf16.mxu0 0
        %393 = vmatpush2.bf16.msra.mxu0 0
        %394 = vmatprep.subr.bf16.mxu0 0
        %395 = vmatpush2.bf16.msra.mxu0 0
        %396 = vmatprep.subr.bf16.mxu0 0
        %397 = vmatpush2.bf16.msra.mxu0 0
        %398 = vmatprep.subr.bf16.mxu0 0
        %399 = vmatpush2.bf16.msra.mxu0 0
        %400 = vmatprep.subr.bf16.mxu0 0
        %401 = vmatpush2.bf16.msra.mxu0 0
        %402 = vmatprep.subr.bf16.mxu0 0
        %403 = vmatpush2.bf16.msra.mxu0 0
        %404 = vmatprep.mubr.bf16.mxu0 0
        %405 = vmatmul.mubr.bf16.gmra.mxu0 %v364
        %v406 = vpop.f32.mrf.mxu0
        %v407 = vadd.f32 %v357, %v406
        %v408 = vpop.f32.mrf.mxu0
        %v409 = vadd.f32 %v359, %v408
        %v410 = vpop.f32.mrf.mxu0
        %v411 = vpop.f32.mrf.mxu0
        %412 = vdwg.mxu0
        %s413 = scalar_lea.vmem %s1, 8
        %v414 = vld [vmem:[%s413] sm:$0xf]
        %415 = vrot.lane.b32.xlu0 %v303, 126
        %v416 = vpop.permute.xlu0 %415
        %417 = vrot.lane.b32.xlu0 %v304, 126
        %v418 = vpop.permute.xlu0 %417
        %vm419 = vcmask 1031168
        %v420 = vsel %vm419, %v416, %v418
        %v422 = vsel %vm311, %v414, 0
        %v425 = vsel %vm315, %v420, 0
        %v428 = vsel %vm315, %v418, 0
        %430 = vmatprep.subr.bf16.mxu0 0
        %431 = vmatpush1.bf16.msra.mxu0 0
        %432 = vmatprep.subr.bf16.mxu0 0
        %433 = vmatpush1.bf16.msra.mxu0 0
        %434 = vmatprep.subr.bf16.mxu0 0
        %435 = vmatpush1.bf16.msra.mxu0 0
        %436 = vmatprep.subr.bf16.mxu0 0
        %437 = vmatpush1.bf16.msra.mxu0 0
        %438 = vmatprep.subr.bf16.mxu0 0
        %439 = vmatpush1.bf16.msra.mxu0 0
        %440 = vmatprep.subr.bf16.mxu0 0
        %441 = vmatpush1.bf16.msra.mxu0 0
        %442 = vmatprep.subr.bf16.mxu0 0
        %443 = vmatpush1.bf16.msra.mxu0 0
        %444 = vmatprep.subr.bf16.mxu0 %v428
        %445 = vmatpush1.bf16.msra.mxu0 %v425
        %446 = vmatprep.subr.bf16.mxu0 0
        %447 = vmatpush2.bf16.msra.mxu0 0
        %448 = vmatprep.subr.bf16.mxu0 0
        %449 = vmatpush2.bf16.msra.mxu0 0
        %450 = vmatprep.subr.bf16.mxu0 0
        %451 = vmatpush2.bf16.msra.mxu0 0
        %452 = vmatprep.subr.bf16.mxu0 0
        %453 = vmatpush2.bf16.msra.mxu0 0
        %454 = vmatprep.subr.bf16.mxu0 0
        %455 = vmatpush2.bf16.msra.mxu0 0
        %456 = vmatprep.subr.bf16.mxu0 0
        %457 = vmatpush2.bf16.msra.mxu0 0
        %458 = vmatprep.subr.bf16.mxu0 0
        %459 = vmatpush2.bf16.msra.mxu0 0
        %460 = vmatprep.subr.bf16.mxu0 0
        %461 = vmatpush2.bf16.msra.mxu0 0
        %462 = vmatprep.mubr.bf16.mxu0 0
        %463 = vmatmul.mubr.bf16.gmra.mxu0 %v422
        %v464 = vpop.f32.mrf.mxu0
        %v465 = vadd.f32 0.0, %v464
        %v466 = vpop.f32.mrf.mxu0
        %v467 = vadd.f32 0.0, %v466
        %v468 = vpop.f32.mrf.mxu0
        %v469 = vpop.f32.mrf.mxu0
        %470 = vdwg.mxu0
        %v471 = vadd.f32 %v407, %v465
        %v472 = vadd.f32 %v409, %v467
        %s473 = scalar_lea.vmem %s1, 12
        %v474 = vld [vmem:[%s473] sm:$0xf]
        %475 = vrot.lane.b32.xlu0 %v303, 110
        %v476 = vpop.permute.xlu0 %475
        %477 = vrot.lane.b32.xlu0 %v304, 110
        %v478 = vpop.permute.xlu0 %477
        %vm479 = vcmask 900096
        %v480 = vsel %vm479, %v476, %v478
        %v482 = vsel %vm311, %v474, 0
        %v485 = vsel %vm315, %v480, 0
        %v488 = vsel %vm315, %v478, 0
        %490 = vmatprep.subr.bf16.mxu0 0
        %491 = vmatpush1.bf16.msra.mxu0 0
        %492 = vmatprep.subr.bf16.mxu0 0
        %493 = vmatpush1.bf16.msra.mxu0 0
        %494 = vmatprep.subr.bf16.mxu0 0
        %495 = vmatpush1.bf16.msra.mxu0 0
        %496 = vmatprep.subr.bf16.mxu0 0
        %497 = vmatpush1.bf16.msra.mxu0 0
        %498 = vmatprep.subr.bf16.mxu0 0
        %499 = vmatpush1.bf16.msra.mxu0 0
        %500 = vmatprep.subr.bf16.mxu0 0
        %501 = vmatpush1.bf16.msra.mxu0 0
        %502 = vmatprep.subr.bf16.mxu0 0
        %503 = vmatpush1.bf16.msra.mxu0 0
        %504 = vmatprep.subr.bf16.mxu0 %v488
        %505 = vmatpush1.bf16.msra.mxu0 %v485
        %506 = vmatprep.subr.bf16.mxu0 0
        %507 = vmatpush2.bf16.msra.mxu0 0
        %508 = vmatprep.subr.bf16.mxu0 0
        %509 = vmatpush2.bf16.msra.mxu0 0
        %510 = vmatprep.subr.bf16.mxu0 0
        %511 = vmatpush2.bf16.msra.mxu0 0
        %512 = vmatprep.subr.bf16.mxu0 0
        %513 = vmatpush2.bf16.msra.mxu0 0
        %514 = vmatprep.subr.bf16.mxu0 0
        %515 = vmatpush2.bf16.msra.mxu0 0
        %516 = vmatprep.subr.bf16.mxu0 0
        %517 = vmatpush2.bf16.msra.mxu0 0
        %518 = vmatprep.subr.bf16.mxu0 0
        %519 = vmatpush2.bf16.msra.mxu0 0
        %520 = vmatprep.subr.bf16.mxu0 0
        %521 = vmatpush2.bf16.msra.mxu0 0
        %522 = vmatprep.mubr.bf16.mxu0 0
        %523 = vmatmul.mubr.bf16.gmra.mxu0 %v482
        %v524 = vpop.f32.mrf.mxu0
        %v525 = vadd.f32 0.0, %v524
        %v526 = vpop.f32.mrf.mxu0
        %v527 = vadd.f32 0.0, %v526
        %v528 = vpop.f32.mrf.mxu0
        %v529 = vpop.f32.mrf.mxu0
        %530 = vdwg.mxu0
        %v531 = vadd.f32 %v471, %v525
        %v532 = vadd.f32 %v472, %v527
        %s533 = scalar_lea.vmem %s1, 16
        %v534 = vld [vmem:[%s533] sm:$0xf]
        %535 = vrot.lane.b32.xlu0 %v303, 109
        %v536 = vpop.permute.xlu0 %535
        %537 = vrot.lane.b32.xlu0 %v304, 109
        %v538 = vpop.permute.xlu0 %537
        %vm539 = vcmask 891904
        %v540 = vsel %vm539, %v536, %v538
        %v542 = vsel %vm311, %v534, 0
        %v545 = vsel %vm315, %v540, 0
        %v548 = vsel %vm315, %v538, 0
        %550 = vmatprep.subr.bf16.mxu0 0
        %551 = vmatpush1.bf16.msra.mxu0 0
        %552 = vmatprep.subr.bf16.mxu0 0
        %553 = vmatpush1.bf16.msra.mxu0 0
        %554 = vmatprep.subr.bf16.mxu0 0
        %555 = vmatpush1.bf16.msra.mxu0 0
        %556 = vmatprep.subr.bf16.mxu0 0
        %557 = vmatpush1.bf16.msra.mxu0 0
        %558 = vmatprep.subr.bf16.mxu0 0
        %559 = vmatpush1.bf16.msra.mxu0 0
        %560 = vmatprep.subr.bf16.mxu0 0
        %561 = vmatpush1.bf16.msra.mxu0 0
        %562 = vmatprep.subr.bf16.mxu0 0
        %563 = vmatpush1.bf16.msra.mxu0 0
        %564 = vmatprep.subr.bf16.mxu0 %v548
        %565 = vmatpush1.bf16.msra.mxu0 %v545
        %566 = vmatprep.subr.bf16.mxu0 0
        %567 = vmatpush2.bf16.msra.mxu0 0
        %568 = vmatprep.subr.bf16.mxu0 0
        %569 = vmatpush2.bf16.msra.mxu0 0
        %570 = vmatprep.subr.bf16.mxu0 0
        %571 = vmatpush2.bf16.msra.mxu0 0
        %572 = vmatprep.subr.bf16.mxu0 0
        %573 = vmatpush2.bf16.msra.mxu0 0
        %574 = vmatprep.subr.bf16.mxu0 0
        %575 = vmatpush2.bf16.msra.mxu0 0
        %576 = vmatprep.subr.bf16.mxu0 0
        %577 = vmatpush2.bf16.msra.mxu0 0
        %578 = vmatprep.subr.bf16.mxu0 0
        %579 = vmatpush2.bf16.msra.mxu0 0
        %580 = vmatprep.subr.bf16.mxu0 0
        %581 = vmatpush2.bf16.msra.mxu0 0
        %582 = vmatprep.mubr.bf16.mxu0 0
        %583 = vmatmul.mubr.bf16.gmra.mxu0 %v542
        %v584 = vpop.f32.mrf.mxu0
        %v585 = vadd.f32 0.0, %v584
        %v586 = vpop.f32.mrf.mxu0
        %v587 = vadd.f32 0.0, %v586
        %v588 = vpop.f32.mrf.mxu0
        %v589 = vpop.f32.mrf.mxu0
        %590 = vdwg.mxu0
        %v591 = vadd.f32 %v531, %v585
        %v592 = vadd.f32 %v532, %v587
        %s593 = scalar_lea.vmem %s1, 20
        %v594 = vld [vmem:[%s593] sm:$0xf]
        %595 = vrot.lane.b32.xlu0 %v303, 108
        %v596 = vpop.permute.xlu0 %595
        %597 = vrot.lane.b32.xlu0 %v304, 108
        %v598 = vpop.permute.xlu0 %597
        %vm599 = vcmask 883712
        %v600 = vsel %vm599, %v596, %v598
        %v602 = vsel %vm311, %v594, 0
        %v605 = vsel %vm315, %v600, 0
        %v608 = vsel %vm315, %v598, 0
        %610 = vmatprep.subr.bf16.mxu0 0
        %611 = vmatpush1.bf16.msra.mxu0 0
        %612 = vmatprep.subr.bf16.mxu0 0
        %613 = vmatpush1.bf16.msra.mxu0 0
        %614 = vmatprep.subr.bf16.mxu0 0
        %615 = vmatpush1.bf16.msra.mxu0 0
        %616 = vmatprep.subr.bf16.mxu0 0
        %617 = vmatpush1.bf16.msra.mxu0 0
        %618 = vmatprep.subr.bf16.mxu0 0
        %619 = vmatpush1.bf16.msra.mxu0 0
        %620 = vmatprep.subr.bf16.mxu0 0
        %621 = vmatpush1.bf16.msra.mxu0 0
        %622 = vmatprep.subr.bf16.mxu0 0
        %623 = vmatpush1.bf16.msra.mxu0 0
        %624 = vmatprep.subr.bf16.mxu0 %v608
        %625 = vmatpush1.bf16.msra.mxu0 %v605
        %626 = vmatprep.subr.bf16.mxu0 0
        %627 = vmatpush2.bf16.msra.mxu0 0
        %628 = vmatprep.subr.bf16.mxu0 0
        %629 = vmatpush2.bf16.msra.mxu0 0
        %630 = vmatprep.subr.bf16.mxu0 0
        %631 = vmatpush2.bf16.msra.mxu0 0
        %632 = vmatprep.subr.bf16.mxu0 0
        %633 = vmatpush2.bf16.msra.mxu0 0
        %634 = vmatprep.subr.bf16.mxu0 0
        %635 = vmatpush2.bf16.msra.mxu0 0
        %636 = vmatprep.subr.bf16.mxu0 0
        %637 = vmatpush2.bf16.msra.mxu0 0
        %638 = vmatprep.subr.bf16.mxu0 0
        %639 = vmatpush2.bf16.msra.mxu0 0
        %640 = vmatprep.subr.bf16.mxu0 0
        %641 = vmatpush2.bf16.msra.mxu0 0
        %642 = vmatprep.mubr.bf16.mxu0 0
        %643 = vmatmul.mubr.bf16.gmra.mxu0 %v602
        %v644 = vpop.f32.mrf.mxu0
        %v645 = vadd.f32 0.0, %v644
        %v646 = vpop.f32.mrf.mxu0
        %v647 = vadd.f32 0.0, %v646
        %v648 = vpop.f32.mrf.mxu0
        %v649 = vpop.f32.mrf.mxu0
        %650 = vdwg.mxu0
        %v651 = vadd.f32 %v591, %v645
        %v652 = vadd.f32 %v592, %v647
        %s653 = scalar_lea.vmem %s1, 24
        %v654 = vld [vmem:[%s653] sm:$0xf]
        %655 = vrot.lane.b32.xlu0 %v303, 92
        %v656 = vpop.permute.xlu0 %655
        %657 = vrot.lane.b32.xlu0 %v304, 92
        %v658 = vpop.permute.xlu0 %657
        %vm659 = vcmask 752640
        %v660 = vsel %vm659, %v656, %v658
        %v662 = vsel %vm311, %v654, 0
        %v665 = vsel %vm315, %v660, 0
        %v668 = vsel %vm315, %v658, 0
        %670 = vmatprep.subr.bf16.mxu0 0
        %671 = vmatpush1.bf16.msra.mxu0 0
        %672 = vmatprep.subr.bf16.mxu0 0
        %673 = vmatpush1.bf16.msra.mxu0 0
        %674 = vmatprep.subr.bf16.mxu0 0
        %675 = vmatpush1.bf16.msra.mxu0 0
        %676 = vmatprep.subr.bf16.mxu0 0
        %677 = vmatpush1.bf16.msra.mxu0 0
        %678 = vmatprep.subr.bf16.mxu0 0
        %679 = vmatpush1.bf16.msra.mxu0 0
        %680 = vmatprep.subr.bf16.mxu0 0
        %681 = vmatpush1.bf16.msra.mxu0 0
        %682 = vmatprep.subr.bf16.mxu0 0
        %683 = vmatpush1.bf16.msra.mxu0 0
        %684 = vmatprep.subr.bf16.mxu0 %v668
        %685 = vmatpush1.bf16.msra.mxu0 %v665
        %686 = vmatprep.subr.bf16.mxu0 0
        %687 = vmatpush2.bf16.msra.mxu0 0
        %688 = vmatprep.subr.bf16.mxu0 0
        %689 = vmatpush2.bf16.msra.mxu0 0
        %690 = vmatprep.subr.bf16.mxu0 0
        %691 = vmatpush2.bf16.msra.mxu0 0
        %692 = vmatprep.subr.bf16.mxu0 0
        %693 = vmatpush2.bf16.msra.mxu0 0
        %694 = vmatprep.subr.bf16.mxu0 0
        %695 = vmatpush2.bf16.msra.mxu0 0
        %696 = vmatprep.subr.bf16.mxu0 0
        %697 = vmatpush2.bf16.msra.mxu0 0
        %698 = vmatprep.subr.bf16.mxu0 0
        %699 = vmatpush2.bf16.msra.mxu0 0
        %700 = vmatprep.subr.bf16.mxu0 0
        %701 = vmatpush2.bf16.msra.mxu0 0
        %702 = vmatprep.mubr.bf16.mxu0 0
        %703 = vmatmul.mubr.bf16.gmra.mxu0 %v662
        %v704 = vpop.f32.mrf.mxu0
        %v705 = vadd.f32 0.0, %v704
        %v706 = vpop.f32.mrf.mxu0
        %v707 = vadd.f32 0.0, %v706
        %v708 = vpop.f32.mrf.mxu0
        %v709 = vpop.f32.mrf.mxu0
        %710 = vdwg.mxu0
        %v711 = vadd.f32 %v651, %v705
        %v712 = vadd.f32 %v652, %v707
        %s713 = scalar_lea.vmem %s1, 28
        %v714 = vld [vmem:[%s713] sm:$0xf]
        %715 = vrot.lane.b32.xlu0 %v303, 91
        %v716 = vpop.permute.xlu0 %715
        %717 = vrot.lane.b32.xlu0 %v304, 91
        %v718 = vpop.permute.xlu0 %717
        %vm719 = vcmask 744448
        %v720 = vsel %vm719, %v716, %v718
        %v722 = vsel %vm311, %v714, 0
        %v725 = vsel %vm315, %v720, 0
        %v728 = vsel %vm315, %v718, 0
        %730 = vmatprep.subr.bf16.mxu0 0
        %731 = vmatpush1.bf16.msra.mxu0 0
        %732 = vmatprep.subr.bf16.mxu0 0
        %733 = vmatpush1.bf16.msra.mxu0 0
        %734 = vmatprep.subr.bf16.mxu0 0
        %735 = vmatpush1.bf16.msra.mxu0 0
        %736 = vmatprep.subr.bf16.mxu0 0
        %737 = vmatpush1.bf16.msra.mxu0 0
        %738 = vmatprep.subr.bf16.mxu0 0
        %739 = vmatpush1.bf16.msra.mxu0 0
        %740 = vmatprep.subr.bf16.mxu0 0
        %741 = vmatpush1.bf16.msra.mxu0 0
        %742 = vmatprep.subr.bf16.mxu0 0
        %743 = vmatpush1.bf16.msra.mxu0 0
        %744 = vmatprep.subr.bf16.mxu0 %v728
        %745 = vmatpush1.bf16.msra.mxu0 %v725
        %746 = vmatprep.subr.bf16.mxu0 0
        %747 = vmatpush2.bf16.msra.mxu0 0
        %748 = vmatprep.subr.bf16.mxu0 0
        %749 = vmatpush2.bf16.msra.mxu0 0
        %750 = vmatprep.subr.bf16.mxu0 0
        %751 = vmatpush2.bf16.msra.mxu0 0
        %752 = vmatprep.subr.bf16.mxu0 0
        %753 = vmatpush2.bf16.msra.mxu0 0
        %754 = vmatprep.subr.bf16.mxu0 0
        %755 = vmatpush2.bf16.msra.mxu0 0
        %756 = vmatprep.subr.bf16.mxu0 0
        %757 = vmatpush2.bf16.msra.mxu0 0
        %758 = vmatprep.subr.bf16.mxu0 0
        %759 = vmatpush2.bf16.msra.mxu0 0
        %760 = vmatprep.subr.bf16.mxu0 0
        %761 = vmatpush2.bf16.msra.mxu0 0
        %762 = vmatprep.mubr.bf16.mxu0 0
        %763 = vmatmul.mubr.bf16.gmra.mxu0 %v722
        %v764 = vpop.f32.mrf.mxu0
        %v765 = vadd.f32 0.0, %v764
        %v766 = vpop.f32.mrf.mxu0
        %v767 = vadd.f32 0.0, %v766
        %v768 = vpop.f32.mrf.mxu0
        %v769 = vpop.f32.mrf.mxu0
        %770 = vdwg.mxu0
        %v771 = vadd.f32 %v711, %v765
        %v772 = vadd.f32 %v712, %v767
        %s773 = scalar_lea.vmem %s1, 32
        %v774 = vld [vmem:[%s773] sm:$0xf]
        %775 = vrot.lane.b32.xlu0 %v303, 90
        %v776 = vpop.permute.xlu0 %775
        %777 = vrot.lane.b32.xlu0 %v304, 90
        %v778 = vpop.permute.xlu0 %777
        %vm779 = vcmask 736256
        %v780 = vsel %vm779, %v776, %v778
        %v782 = vsel %vm311, %v774, 0
        %v785 = vsel %vm315, %v780, 0
        %v788 = vsel %vm315, %v778, 0
        %790 = vmatprep.subr.bf16.mxu0 0
        %791 = vmatpush1.bf16.msra.mxu0 0
        %792 = vmatprep.subr.bf16.mxu0 0
        %793 = vmatpush1.bf16.msra.mxu0 0
        %794 = vmatprep.subr.bf16.mxu0 0
        %795 = vmatpush1.bf16.msra.mxu0 0
        %796 = vmatprep.subr.bf16.mxu0 0
        %797 = vmatpush1.bf16.msra.mxu0 0
        %798 = vmatprep.subr.bf16.mxu0 0
        %799 = vmatpush1.bf16.msra.mxu0 0
        %800 = vmatprep.subr.bf16.mxu0 0
        %801 = vmatpush1.bf16.msra.mxu0 0
        %802 = vmatprep.subr.bf16.mxu0 0
        %803 = vmatpush1.bf16.msra.mxu0 0
        %804 = vmatprep.subr.bf16.mxu0 %v788
        %805 = vmatpush1.bf16.msra.mxu0 %v785
        %806 = vmatprep.subr.bf16.mxu0 0
        %807 = vmatpush2.bf16.msra.mxu0 0
        %808 = vmatprep.subr.bf16.mxu0 0
        %809 = vmatpush2.bf16.msra.mxu0 0
        %810 = vmatprep.subr.bf16.mxu0 0
        %811 = vmatpush2.bf16.msra.mxu0 0
        %812 = vmatprep.subr.bf16.mxu0 0
        %813 = vmatpush2.bf16.msra.mxu0 0
        %814 = vmatprep.subr.bf16.mxu0 0
        %815 = vmatpush2.bf16.msra.mxu0 0
        %816 = vmatprep.subr.bf16.mxu0 0
        %817 = vmatpush2.bf16.msra.mxu0 0
        %818 = vmatprep.subr.bf16.mxu0 0
        %819 = vmatpush2.bf16.msra.mxu0 0
        %820 = vmatprep.subr.bf16.mxu0 0
        %821 = vmatpush2.bf16.msra.mxu0 0
        %822 = vmatprep.mubr.bf16.mxu0 0
        %823 = vmatmul.mubr.bf16.gmra.mxu0 %v782
        %v824 = vpop.f32.mrf.mxu0
        %v825 = vadd.f32 0.0, %v824
        %v826 = vpop.f32.mrf.mxu0
        %v827 = vadd.f32 0.0, %v826
        %v828 = vpop.f32.mrf.mxu0
        %v829 = vpop.f32.mrf.mxu0
        %830 = vdwg.mxu0
        %v831 = vadd.f32 %v771, %v825
        %v832 = vadd.f32 %v772, %v827
        %v833 = vld [vmem:[%s2] sm:$0xff]
        %835 = vset.pattern.permute.xlu0 0
        %836 = vperm.xlu0 %835, %v833
        %v837 = vpop.permute.xlu0 %836
        %v839 = vadd.f32 %v831, %v837
        %v840 = vadd.f32 %v832, %v837
        %v841 = vmax.f32 %v839, 0.0
        %v842 = vmax.f32 %v840, 0.0
        %v843 = vld [vmem:[%s294] sm:$0x3]
        %v845 = vlaneseq
        %v846 = vshrl.u32 %v845, 7
        %v847 = vsub.s32 0, %v846
        %v848 = vrot.slane %v843, %v847
        %v849 = vlaneseq
        %v850 = vshrl.u32 %v849, 7
        %v851 = vsub.s32 1, %v850
        %v852 = vrot.slane %v843, %v851
        %v855 = vmul.f32 %v841, %v848
        %v856 = vmul.f32 %v842, %v852
        %v857 = vpack.c.bf16 %v855, %v855
        %v858 = vpack.c.bf16 %v856, %v856
        %v859 = vld [vmem:[%s3] sm:$0xf]
        %s860 = scalar_lea.vmem %s3, 4
        %v861 = vld [vmem:[%s860] sm:$0xf]
        %864 = vrot.lane.b32.xlu0 %v857, 127
        %v865 = vpop.permute.xlu0 %864
        %866 = vrot.lane.b32.xlu0 %v858, 127
        %v867 = vpop.permute.xlu0 %866
        %v868 = vsel %vm309, %v865, %v867
        %v870 = vsel %vm311, %v861, 0
        %v873 = vsel %vm315, %v868, 0
        %v876 = vsel %vm315, %v867, 0
        %878 = vmatprep.subr.bf16.mxu0 0
        %879 = vmatpush1.bf16.msra.mxu0 0
        %880 = vmatprep.subr.bf16.mxu0 0
        %881 = vmatpush1.bf16.msra.mxu0 0
        %882 = vmatprep.subr.bf16.mxu0 0
        %883 = vmatpush1.bf16.msra.mxu0 0
        %884 = vmatprep.subr.bf16.mxu0 0
        %885 = vmatpush1.bf16.msra.mxu0 0
        %886 = vmatprep.subr.bf16.mxu0 0
        %887 = vmatpush1.bf16.msra.mxu0 0
        %888 = vmatprep.subr.bf16.mxu0 0
        %889 = vmatpush1.bf16.msra.mxu0 0
        %890 = vmatprep.subr.bf16.mxu0 0
        %891 = vmatpush1.bf16.msra.mxu0 0
        %892 = vmatprep.subr.bf16.mxu0 %v876
        %893 = vmatpush1.bf16.msra.mxu0 %v873
        %894 = vmatprep.subr.bf16.mxu0 0
        %895 = vmatpush2.bf16.msra.mxu0 0
        %896 = vmatprep.subr.bf16.mxu0 0
        %897 = vmatpush2.bf16.msra.mxu0 0
        %898 = vmatprep.subr.bf16.mxu0 0
        %899 = vmatpush2.bf16.msra.mxu0 0
        %900 = vmatprep.subr.bf16.mxu0 0
        %901 = vmatpush2.bf16.msra.mxu0 0
        %902 = vmatprep.subr.bf16.mxu0 0
        %903 = vmatpush2.bf16.msra.mxu0 0
        %904 = vmatprep.subr.bf16.mxu0 0
        %905 = vmatpush2.bf16.msra.mxu0 0
        %906 = vmatprep.subr.bf16.mxu0 0
        %907 = vmatpush2.bf16.msra.mxu0 0
        %908 = vmatprep.subr.bf16.mxu0 0
        %909 = vmatpush2.bf16.msra.mxu0 0
        %910 = vmatprep.mubr.bf16.mxu0 0
        %911 = vmatmul.mubr.bf16.gmra.mxu0 %v870
        %v912 = vpop.f32.mrf.mxu0
        %v913 = vadd.f32 0.0, %v912
        %v914 = vpop.f32.mrf.mxu0
        %v915 = vadd.f32 0.0, %v914
        %v916 = vpop.f32.mrf.mxu0
        %v917 = vpop.f32.mrf.mxu0
        %918 = vdwg.mxu0
        %v920 = vsel %vm311, %v859, 0
        %v923 = vsel %vm315, %v857, 0
        %v926 = vsel %vm315, %v858, 0
        %928 = vmatprep.subr.bf16.mxu0 0
        %929 = vmatpush1.bf16.msra.mxu0 0
        %930 = vmatprep.subr.bf16.mxu0 0
        %931 = vmatpush1.bf16.msra.mxu0 0
        %932 = vmatprep.subr.bf16.mxu0 0
        %933 = vmatpush1.bf16.msra.mxu0 0
        %934 = vmatprep.subr.bf16.mxu0 0
        %935 = vmatpush1.bf16.msra.mxu0 0
        %936 = vmatprep.subr.bf16.mxu0 0
        %937 = vmatpush1.bf16.msra.mxu0 0
        %938 = vmatprep.subr.bf16.mxu0 0
        %939 = vmatpush1.bf16.msra.mxu0 0
        %940 = vmatprep.subr.bf16.mxu0 0
        %941 = vmatpush1.bf16.msra.mxu0 0
        %942 = vmatprep.subr.bf16.mxu0 %v926
        %943 = vmatpush1.bf16.msra.mxu0 %v923
        %944 = vmatprep.subr.bf16.mxu0 0
        %945 = vmatpush2.bf16.msra.mxu0 0
        %946 = vmatprep.subr.bf16.mxu0 0
        %947 = vmatpush2.bf16.msra.mxu0 0
        %948 = vmatprep.subr.bf16.mxu0 0
        %949 = vmatpush2.bf16.msra.mxu0 0
        %950 = vmatprep.subr.bf16.mxu0 0
        %951 = vmatpush2.bf16.msra.mxu0 0
        %952 = vmatprep.subr.bf16.mxu0 0
        %953 = vmatpush2.bf16.msra.mxu0 0
        %954 = vmatprep.subr.bf16.mxu0 0
        %955 = vmatpush2.bf16.msra.mxu0 0
        %956 = vmatprep.subr.bf16.mxu0 0
        %957 = vmatpush2.bf16.msra.mxu0 0
        %958 = vmatprep.subr.bf16.mxu0 0
        %959 = vmatpush2.bf16.msra.mxu0 0
        %960 = vmatprep.mubr.bf16.mxu0 0
        %961 = vmatmul.mubr.bf16.gmra.mxu0 %v920
        %v962 = vpop.f32.mrf.mxu0
        %v963 = vadd.f32 %v913, %v962
        %v964 = vpop.f32.mrf.mxu0
        %v965 = vadd.f32 %v915, %v964
        %v966 = vpop.f32.mrf.mxu0
        %v967 = vpop.f32.mrf.mxu0
        %968 = vdwg.mxu0
        %s969 = scalar_lea.vmem %s3, 8
        %v970 = vld [vmem:[%s969] sm:$0xf]
        %971 = vrot.lane.b32.xlu0 %v857, 126
        %v972 = vpop.permute.xlu0 %971
        %973 = vrot.lane.b32.xlu0 %v858, 126
        %v974 = vpop.permute.xlu0 %973
        %v975 = vsel %vm419, %v972, %v974
        %v977 = vsel %vm311, %v970, 0
        %v980 = vsel %vm315, %v975, 0
        %v983 = vsel %vm315, %v974, 0
        %985 = vmatprep.subr.bf16.mxu0 0
        %986 = vmatpush1.bf16.msra.mxu0 0
        %987 = vmatprep.subr.bf16.mxu0 0
        %988 = vmatpush1.bf16.msra.mxu0 0
        %989 = vmatprep.subr.bf16.mxu0 0
        %990 = vmatpush1.bf16.msra.mxu0 0
        %991 = vmatprep.subr.bf16.mxu0 0
        %992 = vmatpush1.bf16.msra.mxu0 0
        %993 = vmatprep.subr.bf16.mxu0 0
        %994 = vmatpush1.bf16.msra.mxu0 0
        %995 = vmatprep.subr.bf16.mxu0 0
        %996 = vmatpush1.bf16.msra.mxu0 0
        %997 = vmatprep.subr.bf16.mxu0 0
        %998 = vmatpush1.bf16.msra.mxu0 0
        %999 = vmatprep.subr.bf16.mxu0 %v983
        %1000 = vmatpush1.bf16.msra.mxu0 %v980
        %1001 = vmatprep.subr.bf16.mxu0 0
        %1002 = vmatpush2.bf16.msra.mxu0 0
        %1003 = vmatprep.subr.bf16.mxu0 0
        %1004 = vmatpush2.bf16.msra.mxu0 0
        %1005 = vmatprep.subr.bf16.mxu0 0
        %1006 = vmatpush2.bf16.msra.mxu0 0
        %1007 = vmatprep.subr.bf16.mxu0 0
        %1008 = vmatpush2.bf16.msra.mxu0 0
        %1009 = vmatprep.subr.bf16.mxu0 0
        %1010 = vmatpush2.bf16.msra.mxu0 0
        %1011 = vmatprep.subr.bf16.mxu0 0
        %1012 = vmatpush2.bf16.msra.mxu0 0
        %1013 = vmatprep.subr.bf16.mxu0 0
        %1014 = vmatpush2.bf16.msra.mxu0 0
        %1015 = vmatprep.subr.bf16.mxu0 0
        %1016 = vmatpush2.bf16.msra.mxu0 0
        %1017 = vmatprep.mubr.bf16.mxu0 0
        %1018 = vmatmul.mubr.bf16.gmra.mxu0 %v977
        %v1019 = vpop.f32.mrf.mxu0
        %v1020 = vadd.f32 0.0, %v1019
        %v1021 = vpop.f32.mrf.mxu0
        %v1022 = vadd.f32 0.0, %v1021
        %v1023 = vpop.f32.mrf.mxu0
        %v1024 = vpop.f32.mrf.mxu0
        %1025 = vdwg.mxu0
        %v1026 = vadd.f32 %v963, %v1020
        %v1027 = vadd.f32 %v965, %v1022
        %s1028 = scalar_lea.vmem %s3, 12
        %v1029 = vld [vmem:[%s1028] sm:$0xf]
        %1030 = vrot.lane.b32.xlu0 %v857, 110
        %v1031 = vpop.permute.xlu0 %1030
        %1032 = vrot.lane.b32.xlu0 %v858, 110
        %v1033 = vpop.permute.xlu0 %1032
        %v1034 = vsel %vm479, %v1031, %v1033
        %v1036 = vsel %vm311, %v1029, 0
        %v1039 = vsel %vm315, %v1034, 0
        %v1042 = vsel %vm315, %v1033, 0
        %1044 = vmatprep.subr.bf16.mxu0 0
        %1045 = vmatpush1.bf16.msra.mxu0 0
        %1046 = vmatprep.subr.bf16.mxu0 0
        %1047 = vmatpush1.bf16.msra.mxu0 0
        %1048 = vmatprep.subr.bf16.mxu0 0
        %1049 = vmatpush1.bf16.msra.mxu0 0
        %1050 = vmatprep.subr.bf16.mxu0 0
        %1051 = vmatpush1.bf16.msra.mxu0 0
        %1052 = vmatprep.subr.bf16.mxu0 0
        %1053 = vmatpush1.bf16.msra.mxu0 0
        %1054 = vmatprep.subr.bf16.mxu0 0
        %1055 = vmatpush1.bf16.msra.mxu0 0
        %1056 = vmatprep.subr.bf16.mxu0 0
        %1057 = vmatpush1.bf16.msra.mxu0 0
        %1058 = vmatprep.subr.bf16.mxu0 %v1042
        %1059 = vmatpush1.bf16.msra.mxu0 %v1039
        %1060 = vmatprep.subr.bf16.mxu0 0
        %1061 = vmatpush2.bf16.msra.mxu0 0
        %1062 = vmatprep.subr.bf16.mxu0 0
        %1063 = vmatpush2.bf16.msra.mxu0 0
        %1064 = vmatprep.subr.bf16.mxu0 0
        %1065 = vmatpush2.bf16.msra.mxu0 0
        %1066 = vmatprep.subr.bf16.mxu0 0
        %1067 = vmatpush2.bf16.msra.mxu0 0
        %1068 = vmatprep.subr.bf16.mxu0 0
        %1069 = vmatpush2.bf16.msra.mxu0 0
        %1070 = vmatprep.subr.bf16.mxu0 0
        %1071 = vmatpush2.bf16.msra.mxu0 0
        %1072 = vmatprep.subr.bf16.mxu0 0
        %1073 = vmatpush2.bf16.msra.mxu0 0
        %1074 = vmatprep.subr.bf16.mxu0 0
        %1075 = vmatpush2.bf16.msra.mxu0 0
        %1076 = vmatprep.mubr.bf16.mxu0 0
        %1077 = vmatmul.mubr.bf16.gmra.mxu0 %v1036
        %v1078 = vpop.f32.mrf.mxu0
        %v1079 = vadd.f32 0.0, %v1078
        %v1080 = vpop.f32.mrf.mxu0
        %v1081 = vadd.f32 0.0, %v1080
        %v1082 = vpop.f32.mrf.mxu0
        %v1083 = vpop.f32.mrf.mxu0
        %1084 = vdwg.mxu0
        %v1085 = vadd.f32 %v1026, %v1079
        %v1086 = vadd.f32 %v1027, %v1081
        %s1087 = scalar_lea.vmem %s3, 16
        %v1088 = vld [vmem:[%s1087] sm:$0xf]
        %1089 = vrot.lane.b32.xlu0 %v857, 109
        %v1090 = vpop.permute.xlu0 %1089
        %1091 = vrot.lane.b32.xlu0 %v858, 109
        %v1092 = vpop.permute.xlu0 %1091
        %v1093 = vsel %vm539, %v1090, %v1092
        %v1095 = vsel %vm311, %v1088, 0
        %v1098 = vsel %vm315, %v1093, 0
        %v1101 = vsel %vm315, %v1092, 0
        %1103 = vmatprep.subr.bf16.mxu0 0
        %1104 = vmatpush1.bf16.msra.mxu0 0
        %1105 = vmatprep.subr.bf16.mxu0 0
        %1106 = vmatpush1.bf16.msra.mxu0 0
        %1107 = vmatprep.subr.bf16.mxu0 0
        %1108 = vmatpush1.bf16.msra.mxu0 0
        %1109 = vmatprep.subr.bf16.mxu0 0
        %1110 = vmatpush1.bf16.msra.mxu0 0
        %1111 = vmatprep.subr.bf16.mxu0 0
        %1112 = vmatpush1.bf16.msra.mxu0 0
        %1113 = vmatprep.subr.bf16.mxu0 0
        %1114 = vmatpush1.bf16.msra.mxu0 0
        %1115 = vmatprep.subr.bf16.mxu0 0
        %1116 = vmatpush1.bf16.msra.mxu0 0
        %1117 = vmatprep.subr.bf16.mxu0 %v1101
        %1118 = vmatpush1.bf16.msra.mxu0 %v1098
        %1119 = vmatprep.subr.bf16.mxu0 0
        %1120 = vmatpush2.bf16.msra.mxu0 0
        %1121 = vmatprep.subr.bf16.mxu0 0
        %1122 = vmatpush2.bf16.msra.mxu0 0
        %1123 = vmatprep.subr.bf16.mxu0 0
        %1124 = vmatpush2.bf16.msra.mxu0 0
        %1125 = vmatprep.subr.bf16.mxu0 0
        %1126 = vmatpush2.bf16.msra.mxu0 0
        %1127 = vmatprep.subr.bf16.mxu0 0
        %1128 = vmatpush2.bf16.msra.mxu0 0
        %1129 = vmatprep.subr.bf16.mxu0 0
        %1130 = vmatpush2.bf16.msra.mxu0 0
        %1131 = vmatprep.subr.bf16.mxu0 0
        %1132 = vmatpush2.bf16.msra.mxu0 0
        %1133 = vmatprep.subr.bf16.mxu0 0
        %1134 = vmatpush2.bf16.msra.mxu0 0
        %1135 = vmatprep.mubr.bf16.mxu0 0
        %1136 = vmatmul.mubr.bf16.gmra.mxu0 %v1095
        %v1137 = vpop.f32.mrf.mxu0
        %v1138 = vadd.f32 0.0, %v1137
        %v1139 = vpop.f32.mrf.mxu0
        %v1140 = vadd.f32 0.0, %v1139
        %v1141 = vpop.f32.mrf.mxu0
        %v1142 = vpop.f32.mrf.mxu0
        %1143 = vdwg.mxu0
        %v1144 = vadd.f32 %v1085, %v1138
        %v1145 = vadd.f32 %v1086, %v1140
        %s1146 = scalar_lea.vmem %s3, 20
        %v1147 = vld [vmem:[%s1146] sm:$0xf]
        %1148 = vrot.lane.b32.xlu0 %v857, 108
        %v1149 = vpop.permute.xlu0 %1148
        %1150 = vrot.lane.b32.xlu0 %v858, 108
        %v1151 = vpop.permute.xlu0 %1150
        %v1152 = vsel %vm599, %v1149, %v1151
        %v1154 = vsel %vm311, %v1147, 0
        %v1157 = vsel %vm315, %v1152, 0
        %v1160 = vsel %vm315, %v1151, 0
        %1162 = vmatprep.subr.bf16.mxu0 0
        %1163 = vmatpush1.bf16.msra.mxu0 0
        %1164 = vmatprep.subr.bf16.mxu0 0
        %1165 = vmatpush1.bf16.msra.mxu0 0
        %1166 = vmatprep.subr.bf16.mxu0 0
        %1167 = vmatpush1.bf16.msra.mxu0 0
        %1168 = vmatprep.subr.bf16.mxu0 0
        %1169 = vmatpush1.bf16.msra.mxu0 0
        %1170 = vmatprep.subr.bf16.mxu0 0
        %1171 = vmatpush1.bf16.msra.mxu0 0
        %1172 = vmatprep.subr.bf16.mxu0 0
        %1173 = vmatpush1.bf16.msra.mxu0 0
        %1174 = vmatprep.subr.bf16.mxu0 0
        %1175 = vmatpush1.bf16.msra.mxu0 0
        %1176 = vmatprep.subr.bf16.mxu0 %v1160
        %1177 = vmatpush1.bf16.msra.mxu0 %v1157
        %1178 = vmatprep.subr.bf16.mxu0 0
        %1179 = vmatpush2.bf16.msra.mxu0 0
        %1180 = vmatprep.subr.bf16.mxu0 0
        %1181 = vmatpush2.bf16.msra.mxu0 0
        %1182 = vmatprep.subr.bf16.mxu0 0
        %1183 = vmatpush2.bf16.msra.mxu0 0
        %1184 = vmatprep.subr.bf16.mxu0 0
        %1185 = vmatpush2.bf16.msra.mxu0 0
        %1186 = vmatprep.subr.bf16.mxu0 0
        %1187 = vmatpush2.bf16.msra.mxu0 0
        %1188 = vmatprep.subr.bf16.mxu0 0
        %1189 = vmatpush2.bf16.msra.mxu0 0
        %1190 = vmatprep.subr.bf16.mxu0 0
        %1191 = vmatpush2.bf16.msra.mxu0 0
        %1192 = vmatprep.subr.bf16.mxu0 0
        %1193 = vmatpush2.bf16.msra.mxu0 0
        %1194 = vmatprep.mubr.bf16.mxu0 0
        %1195 = vmatmul.mubr.bf16.gmra.mxu0 %v1154
        %v1196 = vpop.f32.mrf.mxu0
        %v1197 = vadd.f32 0.0, %v1196
        %v1198 = vpop.f32.mrf.mxu0
        %v1199 = vadd.f32 0.0, %v1198
        %v1200 = vpop.f32.mrf.mxu0
        %v1201 = vpop.f32.mrf.mxu0
        %1202 = vdwg.mxu0
        %v1203 = vadd.f32 %v1144, %v1197
        %v1204 = vadd.f32 %v1145, %v1199
        %s1205 = scalar_lea.vmem %s3, 24
        %v1206 = vld [vmem:[%s1205] sm:$0xf]
        %1207 = vrot.lane.b32.xlu0 %v857, 92
        %v1208 = vpop.permute.xlu0 %1207
        %1209 = vrot.lane.b32.xlu0 %v858, 92
        %v1210 = vpop.permute.xlu0 %1209
        %v1211 = vsel %vm659, %v1208, %v1210
        %v1213 = vsel %vm311, %v1206, 0
        %v1216 = vsel %vm315, %v1211, 0
        %v1219 = vsel %vm315, %v1210, 0
        %1221 = vmatprep.subr.bf16.mxu0 0
        %1222 = vmatpush1.bf16.msra.mxu0 0
        %1223 = vmatprep.subr.bf16.mxu0 0
        %1224 = vmatpush1.bf16.msra.mxu0 0
        %1225 = vmatprep.subr.bf16.mxu0 0
        %1226 = vmatpush1.bf16.msra.mxu0 0
        %1227 = vmatprep.subr.bf16.mxu0 0
        %1228 = vmatpush1.bf16.msra.mxu0 0
        %1229 = vmatprep.subr.bf16.mxu0 0
        %1230 = vmatpush1.bf16.msra.mxu0 0
        %1231 = vmatprep.subr.bf16.mxu0 0
        %1232 = vmatpush1.bf16.msra.mxu0 0
        %1233 = vmatprep.subr.bf16.mxu0 0
        %1234 = vmatpush1.bf16.msra.mxu0 0
        %1235 = vmatprep.subr.bf16.mxu0 %v1219
        %1236 = vmatpush1.bf16.msra.mxu0 %v1216
        %1237 = vmatprep.subr.bf16.mxu0 0
        %1238 = vmatpush2.bf16.msra.mxu0 0
        %1239 = vmatprep.subr.bf16.mxu0 0
        %1240 = vmatpush2.bf16.msra.mxu0 0
        %1241 = vmatprep.subr.bf16.mxu0 0
        %1242 = vmatpush2.bf16.msra.mxu0 0
        %1243 = vmatprep.subr.bf16.mxu0 0
        %1244 = vmatpush2.bf16.msra.mxu0 0
        %1245 = vmatprep.subr.bf16.mxu0 0
        %1246 = vmatpush2.bf16.msra.mxu0 0
        %1247 = vmatprep.subr.bf16.mxu0 0
        %1248 = vmatpush2.bf16.msra.mxu0 0
        %1249 = vmatprep.subr.bf16.mxu0 0
        %1250 = vmatpush2.bf16.msra.mxu0 0
        %1251 = vmatprep.subr.bf16.mxu0 0
        %1252 = vmatpush2.bf16.msra.mxu0 0
        %1253 = vmatprep.mubr.bf16.mxu0 0
        %1254 = vmatmul.mubr.bf16.gmra.mxu0 %v1213
        %v1255 = vpop.f32.mrf.mxu0
        %v1256 = vadd.f32 0.0, %v1255
        %v1257 = vpop.f32.mrf.mxu0
        %v1258 = vadd.f32 0.0, %v1257
        %v1259 = vpop.f32.mrf.mxu0
        %v1260 = vpop.f32.mrf.mxu0
        %1261 = vdwg.mxu0
        %v1262 = vadd.f32 %v1203, %v1256
        %v1263 = vadd.f32 %v1204, %v1258
        %s1264 = scalar_lea.vmem %s3, 28
        %v1265 = vld [vmem:[%s1264] sm:$0xf]
        %1266 = vrot.lane.b32.xlu0 %v857, 91
        %v1267 = vpop.permute.xlu0 %1266
        %1268 = vrot.lane.b32.xlu0 %v858, 91
        %v1269 = vpop.permute.xlu0 %1268
        %v1270 = vsel %vm719, %v1267, %v1269
        %v1272 = vsel %vm311, %v1265, 0
        %v1275 = vsel %vm315, %v1270, 0
        %v1278 = vsel %vm315, %v1269, 0
        %1280 = vmatprep.subr.bf16.mxu0 0
        %1281 = vmatpush1.bf16.msra.mxu0 0
        %1282 = vmatprep.subr.bf16.mxu0 0
        %1283 = vmatpush1.bf16.msra.mxu0 0
        %1284 = vmatprep.subr.bf16.mxu0 0
        %1285 = vmatpush1.bf16.msra.mxu0 0
        %1286 = vmatprep.subr.bf16.mxu0 0
        %1287 = vmatpush1.bf16.msra.mxu0 0
        %1288 = vmatprep.subr.bf16.mxu0 0
        %1289 = vmatpush1.bf16.msra.mxu0 0
        %1290 = vmatprep.subr.bf16.mxu0 0
        %1291 = vmatpush1.bf16.msra.mxu0 0
        %1292 = vmatprep.subr.bf16.mxu0 0
        %1293 = vmatpush1.bf16.msra.mxu0 0
        %1294 = vmatprep.subr.bf16.mxu0 %v1278
        %1295 = vmatpush1.bf16.msra.mxu0 %v1275
        %1296 = vmatprep.subr.bf16.mxu0 0
        %1297 = vmatpush2.bf16.msra.mxu0 0
        %1298 = vmatprep.subr.bf16.mxu0 0
        %1299 = vmatpush2.bf16.msra.mxu0 0
        %1300 = vmatprep.subr.bf16.mxu0 0
        %1301 = vmatpush2.bf16.msra.mxu0 0
        %1302 = vmatprep.subr.bf16.mxu0 0
        %1303 = vmatpush2.bf16.msra.mxu0 0
        %1304 = vmatprep.subr.bf16.mxu0 0
        %1305 = vmatpush2.bf16.msra.mxu0 0
        %1306 = vmatprep.subr.bf16.mxu0 0
        %1307 = vmatpush2.bf16.msra.mxu0 0
        %1308 = vmatprep.subr.bf16.mxu0 0
        %1309 = vmatpush2.bf16.msra.mxu0 0
        %1310 = vmatprep.subr.bf16.mxu0 0
        %1311 = vmatpush2.bf16.msra.mxu0 0
        %1312 = vmatprep.mubr.bf16.mxu0 0
        %1313 = vmatmul.mubr.bf16.gmra.mxu0 %v1272
        %v1314 = vpop.f32.mrf.mxu0
        %v1315 = vadd.f32 0.0, %v1314
        %v1316 = vpop.f32.mrf.mxu0
        %v1317 = vadd.f32 0.0, %v1316
        %v1318 = vpop.f32.mrf.mxu0
        %v1319 = vpop.f32.mrf.mxu0
        %1320 = vdwg.mxu0
        %v1321 = vadd.f32 %v1262, %v1315
        %v1322 = vadd.f32 %v1263, %v1317
        %s1323 = scalar_lea.vmem %s3, 32
        %v1324 = vld [vmem:[%s1323] sm:$0xf]
        %1325 = vrot.lane.b32.xlu0 %v857, 90
        %v1326 = vpop.permute.xlu0 %1325
        %1327 = vrot.lane.b32.xlu0 %v858, 90
        %v1328 = vpop.permute.xlu0 %1327
        %v1329 = vsel %vm779, %v1326, %v1328
        %v1331 = vsel %vm311, %v1324, 0
        %v1334 = vsel %vm315, %v1329, 0
        %v1337 = vsel %vm315, %v1328, 0
        %1339 = vmatprep.subr.bf16.mxu0 0
        %1340 = vmatpush1.bf16.msra.mxu0 0
        %1341 = vmatprep.subr.bf16.mxu0 0
        %1342 = vmatpush1.bf16.msra.mxu0 0
        %1343 = vmatprep.subr.bf16.mxu0 0
        %1344 = vmatpush1.bf16.msra.mxu0 0
        %1345 = vmatprep.subr.bf16.mxu0 0
        %1346 = vmatpush1.bf16.msra.mxu0 0
        %1347 = vmatprep.subr.bf16.mxu0 0
        %1348 = vmatpush1.bf16.msra.mxu0 0
        %1349 = vmatprep.subr.bf16.mxu0 0
        %1350 = vmatpush1.bf16.msra.mxu0 0
        %1351 = vmatprep.subr.bf16.mxu0 0
        %1352 = vmatpush1.bf16.msra.mxu0 0
        %1353 = vmatprep.subr.bf16.mxu0 %v1337
        %1354 = vmatpush1.bf16.msra.mxu0 %v1334
        %1355 = vmatprep.subr.bf16.mxu0 0
        %1356 = vmatpush2.bf16.msra.mxu0 0
        %1357 = vmatprep.subr.bf16.mxu0 0
        %1358 = vmatpush2.bf16.msra.mxu0 0
        %1359 = vmatprep.subr.bf16.mxu0 0
        %1360 = vmatpush2.bf16.msra.mxu0 0
        %1361 = vmatprep.subr.bf16.mxu0 0
        %1362 = vmatpush2.bf16.msra.mxu0 0
        %1363 = vmatprep.subr.bf16.mxu0 0
        %1364 = vmatpush2.bf16.msra.mxu0 0
        %1365 = vmatprep.subr.bf16.mxu0 0
        %1366 = vmatpush2.bf16.msra.mxu0 0
        %1367 = vmatprep.subr.bf16.mxu0 0
        %1368 = vmatpush2.bf16.msra.mxu0 0
        %1369 = vmatprep.subr.bf16.mxu0 0
        %1370 = vmatpush2.bf16.msra.mxu0 0
        %1371 = vmatprep.mubr.bf16.mxu0 0
        %1372 = vmatmul.mubr.bf16.gmra.mxu0 %v1331
        %v1373 = vpop.f32.mrf.mxu0
        %v1374 = vadd.f32 0.0, %v1373
        %v1375 = vpop.f32.mrf.mxu0
        %v1376 = vadd.f32 0.0, %v1375
        %v1377 = vpop.f32.mrf.mxu0
        %v1378 = vpop.f32.mrf.mxu0
        %1379 = vdwg.mxu0
        %v1380 = vadd.f32 %v1321, %v1374
        %v1381 = vadd.f32 %v1322, %v1376
        %v1382 = vunpack.c.l.bf16 %v296
        %v1383 = vunpack.c.h.bf16 %v296
        %v1384 = vld [vmem:[%s4] sm:$0xff]
        %1386 = vset.pattern.permute.xlu0 0
        %1387 = vperm.xlu0 %1386, %v1384
        %v1388 = vpop.permute.xlu0 %1387
        %v1390 = vadd.f32 %v1380, %v1388
        %v1391 = vadd.f32 %v1381, %v1388
        %1394 = vrot.lane.b32.xlu0 %v1382, 90
        %v1395 = vpop.permute.xlu0 %1394
        %1396 = vrot.lane.b32.xlu0 %v1383, 90
        %v1397 = vpop.permute.xlu0 %1396
        %vm1398 = vcmask 736256
        %v1399 = vsel %vm1398, %v1395, %v1397
        %v1402 = vadd.f32 %v1390, %v1399
        %v1403 = vadd.f32 %v1391, %v1397
        %v1404 = vmax.f32 %v1402, 0.0
        %v1405 = vmax.f32 %v1403, 0.0
        %1406 = vst [vmem:[%s281] sm:$0xff] %v1404
        %vm1407 = vcmask 130048
        %1408 = vst.msk [vmem:[%s281 + $0x8] sm:$0xff] %vm1407, %v1405
        %s1409 = sand.u32 %s180, 1
        %s1410 = scalar_lea.sflag [#allocation3], %s1409
        %s1411 = sand.u32 %s180, 1
        %s1412 = smul.addr %s1411, 16
        %s1413 = scalar_lea.vmem [#allocation2], %s1412
        // Predicated region
        $region45: #{tpu_custom_call.1} parent=43 // pred_check
          %p1414 = pneg %p190
        $region46: #{tpu_custom_call.1} parent=43 // pred_check_branch
          %1416 = sbr.rel (%p1414) target = $region48
        $region47: #{tpu_custom_call.1} parent=43 // pred_region
          %s1418 = ssub.s32 256, 256
          %1419 = vsyncadd %s1410, %s1418
          %s1420 = smul.addr %s25, 2
          %s1421 = smul.addr %s24, 4
          %s1422 = sadd.s32 %s1420, %s1421
          %s1423 = smul.addr %s1422, 128
          %s1424 = scalar_lea.hbm %s6, %s1423
          %s1426 = sshll.u32 %s1413, 4
          %s1427 = int_to_ptr.vmem [resolvable:$true] %s1426
          %1429 = dma.vmem_to_hbm [thread:$0]  %s1427, 256, %s1424, %s1410
        $region48: #{tpu_custom_call.1} parent=43 // pred_fallthru
          _
      $region44: #{tpu_custom_call.1} parent=5 // pred_fallthru
        _
      %p1430 = scmp.le.s32.totalorder 2, %s15
      // Predicated region
      $region49: #{tpu_custom_call.1} parent=5 // pred_check
        %p1431 = pneg %p1430
      $region50: #{tpu_custom_call.1} parent=5 // pred_check_branch
        %1433 = sbr.rel (%p1431) target = $region52
      $region51: #{tpu_custom_call.1} parent=5 // pred_region
        %s1434 = ssub.s32 %s15, 2
        // Predicated region
        $region53: #{tpu_custom_call.1} parent=51 // pred_check
          %p1435 = pneg %p196
        $region54: #{tpu_custom_call.1} parent=51 // pred_check_branch
          %1437 = sbr.rel (%p1435) target = $region56
        $region55: #{tpu_custom_call.1} parent=51 // pred_region
          %s1438 = sand.u32 %s181, 1
          %s1439 = scalar_lea.sflag [#allocation3], %s1438
          %s1440 = sand.u32 %s181, 1
          %s1441 = smul.addr %s1440, 16
          %s1442 = scalar_lea.vmem [#allocation2], %s1441
          %1443 = dma.done %s1439, 256
        $region56: #{tpu_custom_call.1} parent=51 // pred_fallthru
          _
      $region52: #{tpu_custom_call.1} parent=5 // pred_fallthru
        _
    $region6: #{tpu_custom_call.1} parent=1 // loop_footer
      %s19 = sadd.s32 1, %s15
    $region7: #{tpu_custom_call.1} parent=1 // loop_footer_branch
      %14 = sbr.rel target = $region3
    $region8: #{tpu_custom_call.1} parent=1 // loop_exit
      _
    %1444 = vsyncpa [#allocation3], 1
    %s1445 = scalar_lea.sflag [#allocation3], 1
    %1446 = vsyncpa %s1445, 1

</llo_original>
